<compile_context>
chip_gen: v6e
topology: v6e:2x2x1
jax: 0.10.0
libtpu: 0.0.40
codegen_flags: <defaults>
</compile_context>

<pallas_src>
import functools

import jax
import jax.numpy as jnp
from jax import lax
from jax.experimental import pallas as pl
from jax.experimental.pallas import tpu as pltpu


def _rnn_kernel(x_ref, wih_ref, whh_ref, b_ref, sel_ref, out_ref, *,
                seq_len, batch):
    """Whole-sequence Elman-RNN forward + head in one kernel invocation.

    x_ref  : (T*B, I)  time-major flattened inputs (row t*B + b == x[b, t, :])
    wih_ref: (I, H)    W_ih^T
    whh_ref: (H, H)    W_hh^T
    b_ref  : (1, H)    b_ih + b_hh
    sel_ref: (H, 1)    head selector column (+1 at row 1, -1 at row 0)
    out_ref: (T*B, 1)  sigmoid(h_t[:, 1] - h_t[:, 0]), same row layout as x
    """
    T, B = seq_len, batch
    H = whh_ref.shape[1]

    # ---- Phase 1 (non-recurrent): input projection for ALL time steps as a
    #      single MXU matmul; result stays in registers (no scratch, no
    #      reshape).
    xw = jnp.dot(x_ref[...], wih_ref[...], preferred_element_type=jnp.float32)
    xw = xw + b_ref[...]                                     # (T*B, H)

    whh = whh_ref[...]
    sel = sel_ref[...]

    # ---- Phase 2 (serial recurrence): only h @ W_hh -> add -> tanh is on the
    #      critical path.  T is small & static, so a fully unrolled loop with
    #      static register slices of xw gives the shortest chain.
    h = jnp.zeros((B, H), jnp.float32)
    for t in range(T):
        pre = xw[t * B:(t + 1) * B, :] + jnp.dot(
            h, whh, preferred_element_type=jnp.float32)       # (B, H)
        h = jnp.tanh(pre)

        # ---- Phase 3 (head, off the critical path): h[:,1] - h[:,0] as a
        #      tiny selector matmul, sigmoid, store.  Does not feed back into
        #      the recurrence -> free filler in the latency-bound loop.
        d = jnp.dot(h, sel, preferred_element_type=jnp.float32)  # (B, 1)
        out_ref[t * B:(t + 1) * B, :] = jax.nn.sigmoid(d)


def rnn_forward_pallas(x, w_ih, w_hh, b_ih, b_hh):
    """x: (B, T, I) float32 (batch_first, like the PyTorch module).
    Returns (1, T, B) float32, matching the PyTorch forward exactly."""
    B, T, I = x.shape
    H = w_ih.shape[0]
    assert H >= 2, "head reads hidden columns 0 and 1"

    # Layout plumbing done once in XLA, outside the kernel.
    x_flat = jnp.transpose(x, (1, 0, 2)).reshape(T * B, I)   # row t*B+b = x[b,t]
    wih_t = jnp.transpose(w_ih).astype(jnp.float32)          # (I, H)
    whh_t = jnp.transpose(w_hh).astype(jnp.float32)          # (H, H)
    bias = (b_ih + b_hh).reshape(1, H).astype(jnp.float32)   # (1, H)
    sel = (jnp.zeros((H, 1), jnp.float32)
           .at[1, 0].set(1.0)
           .at[0, 0].set(-1.0))                              # (H, 1)

    kernel = functools.partial(_rnn_kernel, seq_len=T, batch=B)

    out = pl.pallas_call(
        kernel,
        out_shape=jax.ShapeDtypeStruct((T * B, 1), jnp.float32),
        grid=(1,),
        in_specs=[
            pl.BlockSpec((T * B, I), lambda i: (0, 0)),
            pl.BlockSpec((I, H), lambda i: (0, 0)),
            pl.BlockSpec((H, H), lambda i: (0, 0)),
            pl.BlockSpec((1, H), lambda i: (0, 0)),
            pl.BlockSpec((H, 1), lambda i: (0, 0)),
        ],
        out_specs=pl.BlockSpec((T * B, 1), lambda i: (0, 0)),
        compiler_params=pltpu.CompilerParams(
            dimension_semantics=("arbitrary",),   # recurrence is serial
        ),
    )(x_flat, wih_t, whh_t, bias, sel)

    return out.reshape(T, B)[None]                # (1, T, B)


def rnn_forward_ref(x, w_ih, w_hh, b_ih, b_hh):
    """Pure-JAX reference matching torch.nn.RNN (tanh) + the module's head."""
    B, T, I = x.shape
    H = w_ih.shape[0]

    def step(h, x_t):
        h_new = jnp.tanh(x_t @ w_ih.T + b_ih + h @ w_hh.T + b_hh)
        return h_new, h_new

    h0 = jnp.zeros((B, H), jnp.float32)
    _, outs = lax.scan(step, h0, jnp.transpose(x, (1, 0, 2)))  # (T, B, H)
    diff = outs[:, :, 1] - outs[:, :, 0]                       # (T, B)
    return jax.nn.sigmoid(diff)[None]                          # (1, T, B)


if __name__ == "__main__":
    # Small shapes consistent with the module's forward.
    B, T, I, H = 2, 8, 4, 32

    key = jax.random.PRNGKey(0)
    kx, k1, k2, k3, k4 = jax.random.split(key, 5)

    # Deterministic parameter init (PyTorch nn.RNN uses U(-1/sqrt(H), 1/sqrt(H))).
    bound = 1.0 / jnp.sqrt(jnp.float32(H))
    x = jax.random.normal(kx, (B, T, I), dtype=jnp.float32)
    w_ih = jax.random.uniform(k1, (H, I), jnp.float32, -bound, bound)
    w_hh = jax.random.uniform(k2, (H, H), jnp.float32, -bound, bound)
    b_ih = jax.random.uniform(k3, (H,), jnp.float32, -bound, bound)
    b_hh = jax.random.uniform(k4, (H,), jnp.float32, -bound, bound)

    out = jax.block_until_ready(rnn_forward_pallas(x, w_ih, w_hh, b_ih, b_hh))
    ref = jax.block_until_ready(rnn_forward_ref(x, w_ih, w_hh, b_ih, b_hh))

    assert out.shape == (1, T, B), out.shape
    assert jnp.allclose(out, ref, atol=1e-5, rtol=1e-5), (
        f"max abs err = {jnp.max(jnp.abs(out - ref))}"
    )
    print("KERNEL_OK")
</pallas_src>

<mosaic_0001>
module attributes {stable_mosaic.version = 11 : i64} {
  func.func @_rnn_kernel(%arg0: i32, %arg1: memref<16x4xf32, #tpu.memory_space<vmem>>, %arg2: memref<4x32xf32, #tpu.memory_space<vmem>>, %arg3: memref<32x32xf32, #tpu.memory_space<vmem>>, %arg4: memref<1x32xf32, #tpu.memory_space<vmem>>, %arg5: memref<32x1xf32, #tpu.memory_space<vmem>>, %arg6: memref<16x1xf32, #tpu.memory_space<vmem>>) attributes {dimension_semantics = [#tpu.dimension_semantics<arbitrary>], iteration_bounds = array<i64: 1>, scalar_prefetch = 0 : i64, scratch_operands = 0 : i64, tpu.core_type = #tpu.core_type<tc>, window_params = [{pipeline_mode = #tpu.pipeline_mode<synchronous>, transform_indices = @transform_0, window_bounds = array<i64: 16, 4>}, {pipeline_mode = #tpu.pipeline_mode<synchronous>, transform_indices = @transform_1, window_bounds = array<i64: 4, 32>}, {pipeline_mode = #tpu.pipeline_mode<synchronous>, transform_indices = @transform_2, window_bounds = array<i64: 32, 32>}, {pipeline_mode = #tpu.pipeline_mode<synchronous>, transform_indices = @transform_3, window_bounds = array<i64: 1, 32>}, {pipeline_mode = #tpu.pipeline_mode<synchronous>, transform_indices = @transform_4, window_bounds = array<i64: 32, 1>}, {pipeline_mode = #tpu.pipeline_mode<synchronous>, transform_indices = @transform_5, window_bounds = array<i64: 16, 1>}]} {
    %c0 = arith.constant 0 : index
    %c0_0 = arith.constant 0 : index
    %0 = vector.load %arg1[%c0, %c0_0] : memref<16x4xf32, #tpu.memory_space<vmem>>, vector<16x4xf32>
    %c0_1 = arith.constant 0 : index
    %c0_2 = arith.constant 0 : index
    %1 = vector.load %arg2[%c0_1, %c0_2] : memref<4x32xf32, #tpu.memory_space<vmem>>, vector<4x32xf32>
    %cst = arith.constant dense<0.000000e+00> : vector<16x32xf32>
    %2 = tpu.matmul %0, %1, %cst {dimension_numbers = #tpu.dot_dimension_numbers<[1], [0], [0], [1], [0, 0, 1, 1], [], []>} : vector<16x4xf32>, vector<4x32xf32>, vector<16x32xf32> -> vector<16x32xf32>
    %c0_3 = arith.constant 0 : index
    %c0_4 = arith.constant 0 : index
    %3 = vector.load %arg4[%c0_3, %c0_4] : memref<1x32xf32, #tpu.memory_space<vmem>>, vector<1x32xf32>
    %4 = vector.broadcast %3 : vector<1x32xf32> to vector<16x32xf32>
    %5 = arith.addf %2, %4 : vector<16x32xf32>
    %c0_5 = arith.constant 0 : index
    %c0_6 = arith.constant 0 : index
    %6 = vector.load %arg3[%c0_5, %c0_6] : memref<32x32xf32, #tpu.memory_space<vmem>>, vector<32x32xf32>
    %c0_7 = arith.constant 0 : index
    %c0_8 = arith.constant 0 : index
    %7 = vector.load %arg5[%c0_7, %c0_8] : memref<32x1xf32, #tpu.memory_space<vmem>>, vector<32x1xf32>
    %cst_9 = arith.constant 0.000000e+00 : f32
    %8 = vector.broadcast %cst_9 : f32 to vector<2x32xf32>
    %9 = vector.extract_strided_slice %5 {offsets = [0, 0], sizes = [2, 32], strides = [1, 1]} : vector<16x32xf32> to vector<2x32xf32>
    %cst_10 = arith.constant dense<0.000000e+00> : vector<2x32xf32>
    %10 = tpu.matmul %8, %6, %cst_10 {dimension_numbers = #tpu.dot_dimension_numbers<[1], [0], [0], [1], [0, 0, 1, 1], [], []>} : vector<2x32xf32>, vector<32x32xf32>, vector<2x32xf32> -> vector<2x32xf32>
    %11 = arith.addf %9, %10 : vector<2x32xf32>
    %12 = math.tanh %11 : vector<2x32xf32>
    %cst_11 = arith.constant dense<0.000000e+00> : vector<2x1xf32>
    %13 = tpu.matmul %12, %7, %cst_11 {dimension_numbers = #tpu.dot_dimension_numbers<[1], [0], [0], [1], [0, 0, 1, 1], [], []>} : vector<2x32xf32>, vector<32x1xf32>, vector<2x1xf32> -> vector<2x1xf32>
    %14 = arith.negf %13 : vector<2x1xf32>
    %15 = math.exp %14 : vector<2x1xf32>
    %cst_12 = arith.constant 1.000000e+00 : f32
    %16 = vector.broadcast %cst_12 : f32 to vector<2x1xf32>
    %17 = arith.addf %16, %15 : vector<2x1xf32>
    %18 = arith.divf %16, %17 : vector<2x1xf32>
    %c0_13 = arith.constant 0 : index
    %c0_14 = arith.constant 0 : index
    %19 = vector.load %arg6[%c0_13, %c0_14] : memref<16x1xf32, #tpu.memory_space<vmem>>, vector<2x1xf32>
    tpu.vector_store %arg6[%c0_13, %c0_14], %18 {strides = array<i32>} : memref<16x1xf32, #tpu.memory_space<vmem>>, vector<2x1xf32>,
    %20 = vector.extract_strided_slice %5 {offsets = [2, 0], sizes = [2, 32], strides = [1, 1]} : vector<16x32xf32> to vector<2x32xf32>
    %cst_15 = arith.constant dense<0.000000e+00> : vector<2x32xf32>
    %21 = tpu.matmul %12, %6, %cst_15 {dimension_numbers = #tpu.dot_dimension_numbers<[1], [0], [0], [1], [0, 0, 1, 1], [], []>} : vector<2x32xf32>, vector<32x32xf32>, vector<2x32xf32> -> vector<2x32xf32>
    %22 = arith.addf %20, %21 : vector<2x32xf32>
    %23 = math.tanh %22 : vector<2x32xf32>
    %cst_16 = arith.constant dense<0.000000e+00> : vector<2x1xf32>
    %24 = tpu.matmul %23, %7, %cst_16 {dimension_numbers = #tpu.dot_dimension_numbers<[1], [0], [0], [1], [0, 0, 1, 1], [], []>} : vector<2x32xf32>, vector<32x1xf32>, vector<2x1xf32> -> vector<2x1xf32>
    %25 = arith.negf %24 : vector<2x1xf32>
    %26 = math.exp %25 : vector<2x1xf32>
    %cst_17 = arith.constant 1.000000e+00 : f32
    %27 = vector.broadcast %cst_17 : f32 to vector<2x1xf32>
    %28 = arith.addf %27, %26 : vector<2x1xf32>
    %29 = arith.divf %27, %28 : vector<2x1xf32>
    %c2 = arith.constant 2 : index
    %c0_18 = arith.constant 0 : index
    %30 = vector.load %arg6[%c2, %c0_18] : memref<16x1xf32, #tpu.memory_space<vmem>>, vector<2x1xf32>
    tpu.vector_store %arg6[%c2, %c0_18], %29 {strides = array<i32>} : memref<16x1xf32, #tpu.memory_space<vmem>>, vector<2x1xf32>,
    %31 = vector.extract_strided_slice %5 {offsets = [4, 0], sizes = [2, 32], strides = [1, 1]} : vector<16x32xf32> to vector<2x32xf32>
    %cst_19 = arith.constant dense<0.000000e+00> : vector<2x32xf32>
    %32 = tpu.matmul %23, %6, %cst_19 {dimension_numbers = #tpu.dot_dimension_numbers<[1], [0], [0], [1], [0, 0, 1, 1], [], []>} : vector<2x32xf32>, vector<32x32xf32>, vector<2x32xf32> -> vector<2x32xf32>
    %33 = arith.addf %31, %32 : vector<2x32xf32>
    %34 = math.tanh %33 : vector<2x32xf32>
    %cst_20 = arith.constant dense<0.000000e+00> : vector<2x1xf32>
    %35 = tpu.matmul %34, %7, %cst_20 {dimension_numbers = #tpu.dot_dimension_numbers<[1], [0], [0], [1], [0, 0, 1, 1], [], []>} : vector<2x32xf32>, vector<32x1xf32>, vector<2x1xf32> -> vector<2x1xf32>
    %36 = arith.negf %35 : vector<2x1xf32>
    %37 = math.exp %36 : vector<2x1xf32>
    %cst_21 = arith.constant 1.000000e+00 : f32
    %38 = vector.broadcast %cst_21 : f32 to vector<2x1xf32>
    %39 = arith.addf %38, %37 : vector<2x1xf32>
    %40 = arith.divf %38, %39 : vector<2x1xf32>
    %c4 = arith.constant 4 : index
    %c0_22 = arith.constant 0 : index
    %41 = vector.load %arg6[%c4, %c0_22] : memref<16x1xf32, #tpu.memory_space<vmem>>, vector<2x1xf32>
    tpu.vector_store %arg6[%c4, %c0_22], %40 {strides = array<i32>} : memref<16x1xf32, #tpu.memory_space<vmem>>, vector<2x1xf32>,
    %42 = vector.extract_strided_slice %5 {offsets = [6, 0], sizes = [2, 32], strides = [1, 1]} : vector<16x32xf32> to vector<2x32xf32>
    %cst_23 = arith.constant dense<0.000000e+00> : vector<2x32xf32>
    %43 = tpu.matmul %34, %6, %cst_23 {dimension_numbers = #tpu.dot_dimension_numbers<[1], [0], [0], [1], [0, 0, 1, 1], [], []>} : vector<2x32xf32>, vector<32x32xf32>, vector<2x32xf32> -> vector<2x32xf32>
    %44 = arith.addf %42, %43 : vector<2x32xf32>
    %45 = math.tanh %44 : vector<2x32xf32>
    %cst_24 = arith.constant dense<0.000000e+00> : vector<2x1xf32>
    %46 = tpu.matmul %45, %7, %cst_24 {dimension_numbers = #tpu.dot_dimension_numbers<[1], [0], [0], [1], [0, 0, 1, 1], [], []>} : vector<2x32xf32>, vector<32x1xf32>, vector<2x1xf32> -> vector<2x1xf32>
    %47 = arith.negf %46 : vector<2x1xf32>
    %48 = math.exp %47 : vector<2x1xf32>
    %cst_25 = arith.constant 1.000000e+00 : f32
    %49 = vector.broadcast %cst_25 : f32 to vector<2x1xf32>
    %50 = arith.addf %49, %48 : vector<2x1xf32>
    %51 = arith.divf %49, %50 : vector<2x1xf32>
    %c6 = arith.constant 6 : index
    %c0_26 = arith.constant 0 : index
    %52 = vector.load %arg6[%c6, %c0_26] : memref<16x1xf32, #tpu.memory_space<vmem>>, vector<2x1xf32>
    tpu.vector_store %arg6[%c6, %c0_26], %51 {strides = array<i32>} : memref<16x1xf32, #tpu.memory_space<vmem>>, vector<2x1xf32>,
    %53 = vector.extract_strided_slice %5 {offsets = [8, 0], sizes = [2, 32], strides = [1, 1]} : vector<16x32xf32> to vector<2x32xf32>
    %cst_27 = arith.constant dense<0.000000e+00> : vector<2x32xf32>
    %54 = tpu.matmul %45, %6, %cst_27 {dimension_numbers = #tpu.dot_dimension_numbers<[1], [0], [0], [1], [0, 0, 1, 1], [], []>} : vector<2x32xf32>, vector<32x32xf32>, vector<2x32xf32> -> vector<2x32xf32>
    %55 = arith.addf %53, %54 : vector<2x32xf32>
    %56 = math.tanh %55 : vector<2x32xf32>
    %cst_28 = arith.constant dense<0.000000e+00> : vector<2x1xf32>
    %57 = tpu.matmul %56, %7, %cst_28 {dimension_numbers = #tpu.dot_dimension_numbers<[1], [0], [0], [1], [0, 0, 1, 1], [], []>} : vector<2x32xf32>, vector<32x1xf32>, vector<2x1xf32> -> vector<2x1xf32>
    %58 = arith.negf %57 : vector<2x1xf32>
    %59 = math.exp %58 : vector<2x1xf32>
    %cst_29 = arith.constant 1.000000e+00 : f32
    %60 = vector.broadcast %cst_29 : f32 to vector<2x1xf32>
    %61 = arith.addf %60, %59 : vector<2x1xf32>
    %62 = arith.divf %60, %61 : vector<2x1xf32>
    %c8 = arith.constant 8 : index
    %c0_30 = arith.constant 0 : index
    %63 = vector.load %arg6[%c8, %c0_30] : memref<16x1xf32, #tpu.memory_space<vmem>>, vector<2x1xf32>
    tpu.vector_store %arg6[%c8, %c0_30], %62 {strides = array<i32>} : memref<16x1xf32, #tpu.memory_space<vmem>>, vector<2x1xf32>,
    %64 = vector.extract_strided_slice %5 {offsets = [10, 0], sizes = [2, 32], strides = [1, 1]} : vector<16x32xf32> to vector<2x32xf32>
    %cst_31 = arith.constant dense<0.000000e+00> : vector<2x32xf32>
    %65 = tpu.matmul %56, %6, %cst_31 {dimension_numbers = #tpu.dot_dimension_numbers<[1], [0], [0], [1], [0, 0, 1, 1], [], []>} : vector<2x32xf32>, vector<32x32xf32>, vector<2x32xf32> -> vector<2x32xf32>
    %66 = arith.addf %64, %65 : vector<2x32xf32>
    %67 = math.tanh %66 : vector<2x32xf32>
    %cst_32 = arith.constant dense<0.000000e+00> : vector<2x1xf32>
    %68 = tpu.matmul %67, %7, %cst_32 {dimension_numbers = #tpu.dot_dimension_numbers<[1], [0], [0], [1], [0, 0, 1, 1], [], []>} : vector<2x32xf32>, vector<32x1xf32>, vector<2x1xf32> -> vector<2x1xf32>
    %69 = arith.negf %68 : vector<2x1xf32>
    %70 = math.exp %69 : vector<2x1xf32>
    %cst_33 = arith.constant 1.000000e+00 : f32
    %71 = vector.broadcast %cst_33 : f32 to vector<2x1xf32>
    %72 = arith.addf %71, %70 : vector<2x1xf32>
    %73 = arith.divf %71, %72 : vector<2x1xf32>
    %c10 = arith.constant 10 : index
    %c0_34 = arith.constant 0 : index
    %74 = vector.load %arg6[%c10, %c0_34] : memref<16x1xf32, #tpu.memory_space<vmem>>, vector<2x1xf32>
    tpu.vector_store %arg6[%c10, %c0_34], %73 {strides = array<i32>} : memref<16x1xf32, #tpu.memory_space<vmem>>, vector<2x1xf32>,
    %75 = vector.extract_strided_slice %5 {offsets = [12, 0], sizes = [2, 32], strides = [1, 1]} : vector<16x32xf32> to vector<2x32xf32>
    %cst_35 = arith.constant dense<0.000000e+00> : vector<2x32xf32>
    %76 = tpu.matmul %67, %6, %cst_35 {dimension_numbers = #tpu.dot_dimension_numbers<[1], [0], [0], [1], [0, 0, 1, 1], [], []>} : vector<2x32xf32>, vector<32x32xf32>, vector<2x32xf32> -> vector<2x32xf32>
    %77 = arith.addf %75, %76 : vector<2x32xf32>
    %78 = math.tanh %77 : vector<2x32xf32>
    %cst_36 = arith.constant dense<0.000000e+00> : vector<2x1xf32>
    %79 = tpu.matmul %78, %7, %cst_36 {dimension_numbers = #tpu.dot_dimension_numbers<[1], [0], [0], [1], [0, 0, 1, 1], [], []>} : vector<2x32xf32>, vector<32x1xf32>, vector<2x1xf32> -> vector<2x1xf32>
    %80 = arith.negf %79 : vector<2x1xf32>
    %81 = math.exp %80 : vector<2x1xf32>
    %cst_37 = arith.constant 1.000000e+00 : f32
    %82 = vector.broadcast %cst_37 : f32 to vector<2x1xf32>
    %83 = arith.addf %82, %81 : vector<2x1xf32>
    %84 = arith.divf %82, %83 : vector<2x1xf32>
    %c12 = arith.constant 12 : index
    %c0_38 = arith.constant 0 : index
    %85 = vector.load %arg6[%c12, %c0_38] : memref<16x1xf32, #tpu.memory_space<vmem>>, vector<2x1xf32>
    tpu.vector_store %arg6[%c12, %c0_38], %84 {strides = array<i32>} : memref<16x1xf32, #tpu.memory_space<vmem>>, vector<2x1xf32>,
    %86 = vector.extract_strided_slice %5 {offsets = [14, 0], sizes = [2, 32], strides = [1, 1]} : vector<16x32xf32> to vector<2x32xf32>
    %cst_39 = arith.constant dense<0.000000e+00> : vector<2x32xf32>
    %87 = tpu.matmul %78, %6, %cst_39 {dimension_numbers = #tpu.dot_dimension_numbers<[1], [0], [0], [1], [0, 0, 1, 1], [], []>} : vector<2x32xf32>, vector<32x32xf32>, vector<2x32xf32> -> vector<2x32xf32>
    %88 = arith.addf %86, %87 : vector<2x32xf32>
    %89 = math.tanh %88 : vector<2x32xf32>
    %cst_40 = arith.constant dense<0.000000e+00> : vector<2x1xf32>
    %90 = tpu.matmul %89, %7, %cst_40 {dimension_numbers = #tpu.dot_dimension_numbers<[1], [0], [0], [1], [0, 0, 1, 1], [], []>} : vector<2x32xf32>, vector<32x1xf32>, vector<2x1xf32> -> vector<2x1xf32>
    %91 = arith.negf %90 : vector<2x1xf32>
    %92 = math.exp %91 : vector<2x1xf32>
    %cst_41 = arith.constant 1.000000e+00 : f32
    %93 = vector.broadcast %cst_41 : f32 to vector<2x1xf32>
    %94 = arith.addf %93, %92 : vector<2x1xf32>
    %95 = arith.divf %93, %94 : vector<2x1xf32>
    %c14 = arith.constant 14 : index
    %c0_42 = arith.constant 0 : index
    %96 = vector.load %arg6[%c14, %c0_42] : memref<16x1xf32, #tpu.memory_space<vmem>>, vector<2x1xf32>
    tpu.vector_store %arg6[%c14, %c0_42], %95 {strides = array<i32>} : memref<16x1xf32, #tpu.memory_space<vmem>>, vector<2x1xf32>,
    return
  }
  func.func @transform_0(%arg0: i32) -> (i32, i32) {
    %c0_i32 = arith.constant 0 : i32
    %c0_i32_0 = arith.constant 0 : i32
    %c0_i32_1 = arith.constant 0 : i32
    return %c0_i32, %c0_i32_0 : i32, i32
  }
  func.func @transform_1(%arg0: i32) -> (i32, i32) {
    %c0_i32 = arith.constant 0 : i32
    %c0_i32_0 = arith.constant 0 : i32
    %c0_i32_1 = arith.constant 0 : i32
    return %c0_i32, %c0_i32_0 : i32, i32
  }
  func.func @transform_2(%arg0: i32) -> (i32, i32) {
    %c0_i32 = arith.constant 0 : i32
    %c0_i32_0 = arith.constant 0 : i32
    %c0_i32_1 = arith.constant 0 : i32
    return %c0_i32, %c0_i32_0 : i32, i32
  }
  func.func @transform_3(%arg0: i32) -> (i32, i32) {
    %c0_i32 = arith.constant 0 : i32
    %c0_i32_0 = arith.constant 0 : i32
    %c0_i32_1 = arith.constant 0 : i32
    return %c0_i32, %c0_i32_0 : i32, i32
  }
  func.func @transform_4(%arg0: i32) -> (i32, i32) {
    %c0_i32 = arith.constant 0 : i32
    %c0_i32_0 = arith.constant 0 : i32
    %c0_i32_1 = arith.constant 0 : i32
    return %c0_i32, %c0_i32_0 : i32, i32
  }
  func.func @transform_5(%arg0: i32) -> (i32, i32) {
    %c0_i32 = arith.constant 0 : i32
    %c0_i32_0 = arith.constant 0 : i32
    %c0_i32_1 = arith.constant 0 : i32
    return %c0_i32, %c0_i32_0 : i32, i32
  }
}

</mosaic_0001>

<llo_original>
// kernel: tpu_custom_call.1
$region0: #{tpu_custom_call.1}
  #allocation0 [shape = 'u32[]', space=smem, size = 0x4, offset = 0x4, fixed_abs, tag = 'smem constant byte address 0x4 - core index']
  #allocation1 [shape = 'u32[144,128]{1,0:T(1,128)}', space=vmem, size = 0x12000, scoped, tag = 'internal scratch']
  %s0 = inlined_call_operand.vmem [shape: f32[16,4], index: 0, kind: input, shape index: {}]
  %s1 = inlined_call_operand.vmem [shape: f32[4,32], index: 1, kind: input, shape index: {}]
  %s2 = inlined_call_operand.vmem [shape: f32[32,32], index: 2, kind: input, shape index: {}]
  %s3 = inlined_call_operand.vmem [shape: f32[1,32], index: 3, kind: input, shape index: {}]
  %s4 = inlined_call_operand.vmem [shape: f32[32,1], index: 4, kind: input, shape index: {}]
  %s5 = inlined_call_operand.vmem [shape: f32[16,1], index: 5, kind: output, shape index: {}]
  %s6 = sld [smem:[#allocation0]]
  $region30: #{tpu_custom_call.1} parent=0
    _
  %s8 = ssub.s32 1, %s6
  %s9 = scalar_select 0, %s8, %s6
  // Predicated region
  $region2: #{tpu_custom_call.1} parent=0 // pred_check
    _
  $region3: #{tpu_custom_call.1} parent=0 // pred_check_branch
    %11 = sbr.rel (0) target = $region5
  $region4: #{tpu_custom_call.1} parent=0 // pred_region
    _
  $region5: #{tpu_custom_call.1} parent=0 // pred_fallthru
    _
  // Predicated region
  $region6: #{tpu_custom_call.1} parent=0 // pred_check
    _
  $region7: #{tpu_custom_call.1} parent=0 // pred_check_branch
    %13 = sbr.rel (0) target = $region9
  $region8: #{tpu_custom_call.1} parent=0 // pred_region
    _
  $region9: #{tpu_custom_call.1} parent=0 // pred_fallthru
    _
  // Predicated region
  $region10: #{tpu_custom_call.1} parent=0 // pred_check
    _
  $region11: #{tpu_custom_call.1} parent=0 // pred_check_branch
    %15 = sbr.rel (0) target = $region13
  $region12: #{tpu_custom_call.1} parent=0 // pred_region
    _
  $region13: #{tpu_custom_call.1} parent=0 // pred_fallthru
    _
  // Predicated region
  $region14: #{tpu_custom_call.1} parent=0 // pred_check
    _
  $region15: #{tpu_custom_call.1} parent=0 // pred_check_branch
    %17 = sbr.rel (0) target = $region17
  $region16: #{tpu_custom_call.1} parent=0 // pred_region
    _
  $region17: #{tpu_custom_call.1} parent=0 // pred_fallthru
    _
  // Predicated region
  $region18: #{tpu_custom_call.1} parent=0 // pred_check
    _
  $region19: #{tpu_custom_call.1} parent=0 // pred_check_branch
    %19 = sbr.rel (0) target = $region21
  $region20: #{tpu_custom_call.1} parent=0 // pred_region
    _
  $region21: #{tpu_custom_call.1} parent=0 // pred_fallthru
    _
  %v20 = vld [vmem:[%s0] sm:$0xff]
  %v21 = vld [vmem:[%s0 + $0x8] sm:$0xff]
  %v22 = vld [vmem:[%s1] sm:$0xf]
  %v23 = vld [vmem:[%s3] sm:$0x1]
  %v25 = vlaneseq
  %v26 = vshrl.u32 %v25, 7
  %v27 = vsub.s32 0, %v26
  %v28 = vrot.slane %v23, %v27
  %vm30 = vcmask 31744
  %v32 = vsel %vm30, %v20, 0
  %v35 = vsel %vm30, %v21, 0
  %vm37 = vcmask 1043456
  %v39 = vsel %vm37, %v22, 0
  %41 = vmatprep.subr.mxu0 0.0
  %42 = vmatpush1.msra.mxu0 0.0
  %43 = vmatprep.subr.mxu0 0.0
  %44 = vmatpush1.msra.mxu0 0.0
  %45 = vmatprep.subr.mxu0 0.0
  %46 = vmatpush1.msra.mxu0 0.0
  %47 = vmatprep.subr.mxu0 0.0
  %48 = vmatpush1.msra.mxu0 0.0
  %49 = vmatprep.subr.mxu0 0.0
  %50 = vmatpush1.msra.mxu0 0.0
  %51 = vmatprep.subr.mxu0 0.0
  %52 = vmatpush1.msra.mxu0 0.0
  %53 = vmatprep.subr.mxu0 0.0
  %54 = vmatpush1.msra.mxu0 0.0
  %55 = vmatprep.subr.mxu0 0.0
  %56 = vmatpush1.msra.mxu0 0.0
  %57 = vmatprep.subr.mxu0 0.0
  %58 = vmatpush1.msra.mxu0 0.0
  %59 = vmatprep.subr.mxu0 0.0
  %60 = vmatpush1.msra.mxu0 0.0
  %61 = vmatprep.subr.mxu0 0.0
  %62 = vmatpush1.msra.mxu0 0.0
  %63 = vmatprep.subr.mxu0 0.0
  %64 = vmatpush1.msra.mxu0 0.0
  %65 = vmatprep.subr.mxu0 0.0
  %66 = vmatpush1.msra.mxu0 0.0
  %67 = vmatprep.subr.mxu0 0.0
  %68 = vmatpush1.msra.mxu0 0.0
  %69 = vmatprep.subr.mxu0 0.0
  %70 = vmatpush1.msra.mxu0 0.0
  %71 = vmatprep.subr.mxu0 0.0
  %72 = vmatpush1.msra.mxu0 %v39
  %73 = vmatprep.subr.mxu0 0.0
  %74 = vmatpush2.msra.mxu0 0.0
  %75 = vmatprep.subr.mxu0 0.0
  %76 = vmatpush2.msra.mxu0 0.0
  %77 = vmatprep.subr.mxu0 0.0
  %78 = vmatpush2.msra.mxu0 0.0
  %79 = vmatprep.subr.mxu0 0.0
  %80 = vmatpush2.msra.mxu0 0.0
  %81 = vmatprep.subr.mxu0 0.0
  %82 = vmatpush2.msra.mxu0 0.0
  %83 = vmatprep.subr.mxu0 0.0
  %84 = vmatpush2.msra.mxu0 0.0
  %85 = vmatprep.subr.mxu0 0.0
  %86 = vmatpush2.msra.mxu0 0.0
  %87 = vmatprep.subr.mxu0 0.0
  %88 = vmatpush2.msra.mxu0 0.0
  %89 = vmatprep.subr.mxu0 0.0
  %90 = vmatpush2.msra.mxu0 0.0
  %91 = vmatprep.subr.mxu0 0.0
  %92 = vmatpush2.msra.mxu0 0.0
  %93 = vmatprep.subr.mxu0 0.0
  %94 = vmatpush2.msra.mxu0 0.0
  %95 = vmatprep.subr.mxu0 0.0
  %96 = vmatpush2.msra.mxu0 0.0
  %97 = vmatprep.subr.mxu0 0.0
  %98 = vmatpush2.msra.mxu0 0.0
  %99 = vmatprep.subr.mxu0 0.0
  %100 = vmatpush2.msra.mxu0 0.0
  %101 = vmatprep.subr.mxu0 0.0
  %102 = vmatpush2.msra.mxu0 0.0
  %103 = vmatprep.subr.mxu0 0.0
  %104 = vmatpush2.msra.mxu0 0.0
  %105 = vmatprep.mubr.f32.mxu0 0.0
  %106 = vmatmul.mubr.f32.gmra.mxu0 %v32
  %v107 = vpop.f32.mrf.mxu0
  %v108 = vadd.f32 %v28, %v107
  %v109 = vpop.f32.mrf.mxu0
  %110 = vmatprep.mubr.f32.mxu0 0.0
  %111 = vmatmul.mubr.f32.gmra.mxu0 %v35
  %v112 = vpop.f32.mrf.mxu0
  %v113 = vadd.f32 %v28, %v112
  %v114 = vpop.f32.mrf.mxu0
  %115 = vdwg.mxu0
  %v116 = vld [vmem:[%s2] sm:$0xff]
  %v117 = vld [vmem:[%s2 + $0x8] sm:$0xff]
  %v118 = vld [vmem:[%s2 + $0x10] sm:$0xff]
  %v119 = vld [vmem:[%s2 + $0x18] sm:$0xff]
  %v120 = vld [vmem:[%s4] sm:$0xff]
  %v121 = vld [vmem:[%s4 + $0x8] sm:$0xff]
  %v122 = vld [vmem:[%s4 + $0x10] sm:$0xff]
  %v123 = vld [vmem:[%s4 + $0x18] sm:$0xff]
  %vm124 = vcmask 261120
  %v126 = vsel %vm124, 0.0, 0
  %128 = vmatprep.subr.mxu0 0.0
  %129 = vmatpush1.msra.mxu0 0.0
  %130 = vmatprep.subr.mxu0 0.0
  %131 = vmatpush1.msra.mxu0 0.0
  %132 = vmatprep.subr.mxu0 0.0
  %133 = vmatpush1.msra.mxu0 0.0
  %134 = vmatprep.subr.mxu0 0.0
  %135 = vmatpush1.msra.mxu0 0.0
  %136 = vmatprep.subr.mxu0 0.0
  %137 = vmatpush1.msra.mxu0 0.0
  %138 = vmatprep.subr.mxu0 0.0
  %139 = vmatpush1.msra.mxu0 0.0
  %140 = vmatprep.subr.mxu0 0.0
  %141 = vmatpush1.msra.mxu0 0.0
  %142 = vmatprep.subr.mxu0 0.0
  %143 = vmatpush1.msra.mxu0 0.0
  %144 = vmatprep.subr.mxu0 0.0
  %145 = vmatpush1.msra.mxu0 0.0
  %146 = vmatprep.subr.mxu0 0.0
  %147 = vmatpush1.msra.mxu0 0.0
  %148 = vmatprep.subr.mxu0 0.0
  %149 = vmatpush1.msra.mxu0 0.0
  %150 = vmatprep.subr.mxu0 0.0
  %151 = vmatpush1.msra.mxu0 0.0
  %152 = vmatprep.subr.mxu0 0.0
  %153 = vmatpush1.msra.mxu0 %v119
  %154 = vmatprep.subr.mxu0 0.0
  %155 = vmatpush1.msra.mxu0 %v118
  %156 = vmatprep.subr.mxu0 0.0
  %157 = vmatpush1.msra.mxu0 %v117
  %158 = vmatprep.subr.mxu0 0.0
  %159 = vmatpush1.msra.mxu0 %v116
  %160 = vmatprep.subr.mxu0 0.0
  %161 = vmatpush2.msra.mxu0 0.0
  %162 = vmatprep.subr.mxu0 0.0
  %163 = vmatpush2.msra.mxu0 0.0
  %164 = vmatprep.subr.mxu0 0.0
  %165 = vmatpush2.msra.mxu0 0.0
  %166 = vmatprep.subr.mxu0 0.0
  %167 = vmatpush2.msra.mxu0 0.0
  %168 = vmatprep.subr.mxu0 0.0
  %169 = vmatpush2.msra.mxu0 0.0
  %170 = vmatprep.subr.mxu0 0.0
  %171 = vmatpush2.msra.mxu0 0.0
  %172 = vmatprep.subr.mxu0 0.0
  %173 = vmatpush2.msra.mxu0 0.0
  %174 = vmatprep.subr.mxu0 0.0
  %175 = vmatpush2.msra.mxu0 0.0
  %176 = vmatprep.subr.mxu0 0.0
  %177 = vmatpush2.msra.mxu0 0.0
  %178 = vmatprep.subr.mxu0 0.0
  %179 = vmatpush2.msra.mxu0 0.0
  %180 = vmatprep.subr.mxu0 0.0
  %181 = vmatpush2.msra.mxu0 0.0
  %182 = vmatprep.subr.mxu0 0.0
  %183 = vmatpush2.msra.mxu0 0.0
  %184 = vmatprep.subr.mxu0 0.0
  %185 = vmatpush2.msra.mxu0 0.0
  %186 = vmatprep.subr.mxu0 0.0
  %187 = vmatpush2.msra.mxu0 0.0
  %188 = vmatprep.subr.mxu0 0.0
  %189 = vmatpush2.msra.mxu0 0.0
  %190 = vmatprep.subr.mxu0 0.0
  %191 = vmatpush2.msra.mxu0 0.0
  %192 = vmatprep.mubr.f32.mxu0 0.0
  %193 = vmatmul.mubr.f32.gmra.mxu0 %v126
  %v194 = vpop.f32.mrf.mxu0
  %v195 = vadd.f32 0.0, %v194
  %v196 = vpop.f32.mrf.mxu0
  %197 = vdwg.mxu0
  %v198 = vadd.f32 %v108, %v195
  %v199 = vtanh.pop %v198
  %v201 = vsel %vm124, %v199, 0
  %203 = vmatprep.subr.mxu0 0.0
  %204 = vmatpush1.msra.mxu0 0.0
  %205 = vmatprep.subr.mxu0 0.0
  %206 = vmatpush1.msra.mxu0 0.0
  %207 = vmatprep.subr.mxu0 0.0
  %208 = vmatpush1.msra.mxu0 0.0
  %209 = vmatprep.subr.mxu0 0.0
  %210 = vmatpush1.msra.mxu0 0.0
  %211 = vmatprep.subr.mxu0 0.0
  %212 = vmatpush1.msra.mxu0 0.0
  %213 = vmatprep.subr.mxu0 0.0
  %214 = vmatpush1.msra.mxu0 0.0
  %215 = vmatprep.subr.mxu0 0.0
  %216 = vmatpush1.msra.mxu0 0.0
  %217 = vmatprep.subr.mxu0 0.0
  %218 = vmatpush1.msra.mxu0 0.0
  %219 = vmatprep.subr.mxu0 0.0
  %220 = vmatpush1.msra.mxu0 0.0
  %221 = vmatprep.subr.mxu0 0.0
  %222 = vmatpush1.msra.mxu0 0.0
  %223 = vmatprep.subr.mxu0 0.0
  %224 = vmatpush1.msra.mxu0 0.0
  %225 = vmatprep.subr.mxu0 0.0
  %226 = vmatpush1.msra.mxu0 0.0
  %227 = vmatprep.subr.mxu0 0.0
  %228 = vmatpush1.msra.mxu0 %v123
  %229 = vmatprep.subr.mxu0 0.0
  %230 = vmatpush1.msra.mxu0 %v122
  %231 = vmatprep.subr.mxu0 0.0
  %232 = vmatpush1.msra.mxu0 %v121
  %233 = vmatprep.subr.mxu0 0.0
  %234 = vmatpush1.msra.mxu0 %v120
  %235 = vmatprep.subr.mxu0 0.0
  %236 = vmatpush2.msra.mxu0 0.0
  %237 = vmatprep.subr.mxu0 0.0
  %238 = vmatpush2.msra.mxu0 0.0
  %239 = vmatprep.subr.mxu0 0.0
  %240 = vmatpush2.msra.mxu0 0.0
  %241 = vmatprep.subr.mxu0 0.0
  %242 = vmatpush2.msra.mxu0 0.0
  %243 = vmatprep.subr.mxu0 0.0
  %244 = vmatpush2.msra.mxu0 0.0
  %245 = vmatprep.subr.mxu0 0.0
  %246 = vmatpush2.msra.mxu0 0.0
  %247 = vmatprep.subr.mxu0 0.0
  %248 = vmatpush2.msra.mxu0 0.0
  %249 = vmatprep.subr.mxu0 0.0
  %250 = vmatpush2.msra.mxu0 0.0
  %251 = vmatprep.subr.mxu0 0.0
  %252 = vmatpush2.msra.mxu0 0.0
  %253 = vmatprep.subr.mxu0 0.0
  %254 = vmatpush2.msra.mxu0 0.0
  %255 = vmatprep.subr.mxu0 0.0
  %256 = vmatpush2.msra.mxu0 0.0
  %257 = vmatprep.subr.mxu0 0.0
  %258 = vmatpush2.msra.mxu0 0.0
  %259 = vmatprep.subr.mxu0 0.0
  %260 = vmatpush2.msra.mxu0 0.0
  %261 = vmatprep.subr.mxu0 0.0
  %262 = vmatpush2.msra.mxu0 0.0
  %263 = vmatprep.subr.mxu0 0.0
  %264 = vmatpush2.msra.mxu0 0.0
  %265 = vmatprep.subr.mxu0 0.0
  %266 = vmatpush2.msra.mxu0 0.0
  %267 = vmatprep.mubr.f32.mxu0 0.0
  %268 = vmatmul.mubr.f32.gmra.mxu0 %v201
  %v269 = vpop.f32.mrf.mxu0
  %v270 = vadd.f32 0.0, %v269
  %v271 = vpop.f32.mrf.mxu0
  %272 = vdwg.mxu0
  %v273 = vxor.u32 %v270, 2147483648
  %v274 = vmul.f32 %v273, 1.442695
  %v275 = vpow.pop %v274
  %v276 = vadd.f32 %v275, 1.0
  %v277 = vrcp.pop %v276
  %v278 = vmul.f32 1.0, %v277
  %vm279 = vcmask 1024
  %280 = vst.msk [vmem:[%s5] sm:$0x3] %vm279, %v278
  %281 = vmatprep.subr.mxu0 0.0
  %282 = vmatpush1.msra.mxu0 0.0
  %283 = vmatprep.subr.mxu0 0.0
  %284 = vmatpush1.msra.mxu0 0.0
  %285 = vmatprep.subr.mxu0 0.0
  %286 = vmatpush1.msra.mxu0 0.0
  %287 = vmatprep.subr.mxu0 0.0
  %288 = vmatpush1.msra.mxu0 0.0
  %289 = vmatprep.subr.mxu0 0.0
  %290 = vmatpush1.msra.mxu0 0.0
  %291 = vmatprep.subr.mxu0 0.0
  %292 = vmatpush1.msra.mxu0 0.0
  %293 = vmatprep.subr.mxu0 0.0
  %294 = vmatpush1.msra.mxu0 0.0
  %295 = vmatprep.subr.mxu0 0.0
  %296 = vmatpush1.msra.mxu0 0.0
  %297 = vmatprep.subr.mxu0 0.0
  %298 = vmatpush1.msra.mxu0 0.0
  %299 = vmatprep.subr.mxu0 0.0
  %300 = vmatpush1.msra.mxu0 0.0
  %301 = vmatprep.subr.mxu0 0.0
  %302 = vmatpush1.msra.mxu0 0.0
  %303 = vmatprep.subr.mxu0 0.0
  %304 = vmatpush1.msra.mxu0 0.0
  %305 = vmatprep.subr.mxu0 0.0
  %306 = vmatpush1.msra.mxu0 %v119
  %307 = vmatprep.subr.mxu0 0.0
  %308 = vmatpush1.msra.mxu0 %v118
  %309 = vmatprep.subr.mxu0 0.0
  %310 = vmatpush1.msra.mxu0 %v117
  %311 = vmatprep.subr.mxu0 0.0
  %312 = vmatpush1.msra.mxu0 %v116
  %313 = vmatprep.subr.mxu0 0.0
  %314 = vmatpush2.msra.mxu0 0.0
  %315 = vmatprep.subr.mxu0 0.0
  %316 = vmatpush2.msra.mxu0 0.0
  %317 = vmatprep.subr.mxu0 0.0
  %318 = vmatpush2.msra.mxu0 0.0
  %319 = vmatprep.subr.mxu0 0.0
  %320 = vmatpush2.msra.mxu0 0.0
  %321 = vmatprep.subr.mxu0 0.0
  %322 = vmatpush2.msra.mxu0 0.0
  %323 = vmatprep.subr.mxu0 0.0
  %324 = vmatpush2.msra.mxu0 0.0
  %325 = vmatprep.subr.mxu0 0.0
  %326 = vmatpush2.msra.mxu0 0.0
  %327 = vmatprep.subr.mxu0 0.0
  %328 = vmatpush2.msra.mxu0 0.0
  %329 = vmatprep.subr.mxu0 0.0
  %330 = vmatpush2.msra.mxu0 0.0
  %331 = vmatprep.subr.mxu0 0.0
  %332 = vmatpush2.msra.mxu0 0.0
  %333 = vmatprep.subr.mxu0 0.0
  %334 = vmatpush2.msra.mxu0 0.0
  %335 = vmatprep.subr.mxu0 0.0
  %336 = vmatpush2.msra.mxu0 0.0
  %337 = vmatprep.subr.mxu0 0.0
  %338 = vmatpush2.msra.mxu0 0.0
  %339 = vmatprep.subr.mxu0 0.0
  %340 = vmatpush2.msra.mxu0 0.0
  %341 = vmatprep.subr.mxu0 0.0
  %342 = vmatpush2.msra.mxu0 0.0
  %343 = vmatprep.subr.mxu0 0.0
  %344 = vmatpush2.msra.mxu0 0.0
  %345 = vmatprep.mubr.f32.mxu0 0.0
  %346 = vmatmul.mubr.f32.gmra.mxu0 %v201
  %v347 = vpop.f32.mrf.mxu0
  %v348 = vadd.f32 0.0, %v347
  %v349 = vpop.f32.mrf.mxu0
  %350 = vdwg.mxu0
  %v352 = vrot.slane %v348, 6
  %v354 = vadd.f32 %v108, %v352
  %v355 = vtanh.pop %v354
  %v357 = vrot.slane %v355, 2
  %v358 = vsel %vm124, %v357, 0
  %360 = vmatprep.subr.mxu0 0.0
  %361 = vmatpush1.msra.mxu0 0.0
  %362 = vmatprep.subr.mxu0 0.0
  %363 = vmatpush1.msra.mxu0 0.0
  %364 = vmatprep.subr.mxu0 0.0
  %365 = vmatpush1.msra.mxu0 0.0
  %366 = vmatprep.subr.mxu0 0.0
  %367 = vmatpush1.msra.mxu0 0.0
  %368 = vmatprep.subr.mxu0 0.0
  %369 = vmatpush1.msra.mxu0 0.0
  %370 = vmatprep.subr.mxu0 0.0
  %371 = vmatpush1.msra.mxu0 0.0
  %372 = vmatprep.subr.mxu0 0.0
  %373 = vmatpush1.msra.mxu0 0.0
  %374 = vmatprep.subr.mxu0 0.0
  %375 = vmatpush1.msra.mxu0 0.0
  %376 = vmatprep.subr.mxu0 0.0
  %377 = vmatpush1.msra.mxu0 0.0
  %378 = vmatprep.subr.mxu0 0.0
  %379 = vmatpush1.msra.mxu0 0.0
  %380 = vmatprep.subr.mxu0 0.0
  %381 = vmatpush1.msra.mxu0 0.0
  %382 = vmatprep.subr.mxu0 0.0
  %383 = vmatpush1.msra.mxu0 0.0
  %384 = vmatprep.subr.mxu0 0.0
  %385 = vmatpush1.msra.mxu0 %v123
  %386 = vmatprep.subr.mxu0 0.0
  %387 = vmatpush1.msra.mxu0 %v122
  %388 = vmatprep.subr.mxu0 0.0
  %389 = vmatpush1.msra.mxu0 %v121
  %390 = vmatprep.subr.mxu0 0.0
  %391 = vmatpush1.msra.mxu0 %v120
  %392 = vmatprep.subr.mxu0 0.0
  %393 = vmatpush2.msra.mxu0 0.0
  %394 = vmatprep.subr.mxu0 0.0
  %395 = vmatpush2.msra.mxu0 0.0
  %396 = vmatprep.subr.mxu0 0.0
  %397 = vmatpush2.msra.mxu0 0.0
  %398 = vmatprep.subr.mxu0 0.0
  %399 = vmatpush2.msra.mxu0 0.0
  %400 = vmatprep.subr.mxu0 0.0
  %401 = vmatpush2.msra.mxu0 0.0
  %402 = vmatprep.subr.mxu0 0.0
  %403 = vmatpush2.msra.mxu0 0.0
  %404 = vmatprep.subr.mxu0 0.0
  %405 = vmatpush2.msra.mxu0 0.0
  %406 = vmatprep.subr.mxu0 0.0
  %407 = vmatpush2.msra.mxu0 0.0
  %408 = vmatprep.subr.mxu0 0.0
  %409 = vmatpush2.msra.mxu0 0.0
  %410 = vmatprep.subr.mxu0 0.0
  %411 = vmatpush2.msra.mxu0 0.0
  %412 = vmatprep.subr.mxu0 0.0
  %413 = vmatpush2.msra.mxu0 0.0
  %414 = vmatprep.subr.mxu0 0.0
  %415 = vmatpush2.msra.mxu0 0.0
  %416 = vmatprep.subr.mxu0 0.0
  %417 = vmatpush2.msra.mxu0 0.0
  %418 = vmatprep.subr.mxu0 0.0
  %419 = vmatpush2.msra.mxu0 0.0
  %420 = vmatprep.subr.mxu0 0.0
  %421 = vmatpush2.msra.mxu0 0.0
  %422 = vmatprep.subr.mxu0 0.0
  %423 = vmatpush2.msra.mxu0 0.0
  %424 = vmatprep.mubr.f32.mxu0 0.0
  %425 = vmatmul.mubr.f32.gmra.mxu0 %v358
  %v426 = vpop.f32.mrf.mxu0
  %v427 = vadd.f32 0.0, %v426
  %v428 = vpop.f32.mrf.mxu0
  %429 = vdwg.mxu0
  %v430 = vxor.u32 %v427, 2147483648
  %v431 = vmul.f32 %v430, 1.442695
  %v432 = vpow.pop %v431
  %v433 = vadd.f32 %v432, 1.0
  %v434 = vrcp.pop %v433
  %v435 = vmul.f32 1.0, %v434
  %436 = vst.msk [vmem:[%s5 + $0x2] sm:$0x3] %vm279, %v435
  %437 = vmatprep.subr.mxu0 0.0
  %438 = vmatpush1.msra.mxu0 0.0
  %439 = vmatprep.subr.mxu0 0.0
  %440 = vmatpush1.msra.mxu0 0.0
  %441 = vmatprep.subr.mxu0 0.0
  %442 = vmatpush1.msra.mxu0 0.0
  %443 = vmatprep.subr.mxu0 0.0
  %444 = vmatpush1.msra.mxu0 0.0
  %445 = vmatprep.subr.mxu0 0.0
  %446 = vmatpush1.msra.mxu0 0.0
  %447 = vmatprep.subr.mxu0 0.0
  %448 = vmatpush1.msra.mxu0 0.0
  %449 = vmatprep.subr.mxu0 0.0
  %450 = vmatpush1.msra.mxu0 0.0
  %451 = vmatprep.subr.mxu0 0.0
  %452 = vmatpush1.msra.mxu0 0.0
  %453 = vmatprep.subr.mxu0 0.0
  %454 = vmatpush1.msra.mxu0 0.0
  %455 = vmatprep.subr.mxu0 0.0
  %456 = vmatpush1.msra.mxu0 0.0
  %457 = vmatprep.subr.mxu0 0.0
  %458 = vmatpush1.msra.mxu0 0.0
  %459 = vmatprep.subr.mxu0 0.0
  %460 = vmatpush1.msra.mxu0 0.0
  %461 = vmatprep.subr.mxu0 0.0
  %462 = vmatpush1.msra.mxu0 %v119
  %463 = vmatprep.subr.mxu0 0.0
  %464 = vmatpush1.msra.mxu0 %v118
  %465 = vmatprep.subr.mxu0 0.0
  %466 = vmatpush1.msra.mxu0 %v117
  %467 = vmatprep.subr.mxu0 0.0
  %468 = vmatpush1.msra.mxu0 %v116
  %469 = vmatprep.subr.mxu0 0.0
  %470 = vmatpush2.msra.mxu0 0.0
  %471 = vmatprep.subr.mxu0 0.0
  %472 = vmatpush2.msra.mxu0 0.0
  %473 = vmatprep.subr.mxu0 0.0
  %474 = vmatpush2.msra.mxu0 0.0
  %475 = vmatprep.subr.mxu0 0.0
  %476 = vmatpush2.msra.mxu0 0.0
  %477 = vmatprep.subr.mxu0 0.0
  %478 = vmatpush2.msra.mxu0 0.0
  %479 = vmatprep.subr.mxu0 0.0
  %480 = vmatpush2.msra.mxu0 0.0
  %481 = vmatprep.subr.mxu0 0.0
  %482 = vmatpush2.msra.mxu0 0.0
  %483 = vmatprep.subr.mxu0 0.0
  %484 = vmatpush2.msra.mxu0 0.0
  %485 = vmatprep.subr.mxu0 0.0
  %486 = vmatpush2.msra.mxu0 0.0
  %487 = vmatprep.subr.mxu0 0.0
  %488 = vmatpush2.msra.mxu0 0.0
  %489 = vmatprep.subr.mxu0 0.0
  %490 = vmatpush2.msra.mxu0 0.0
  %491 = vmatprep.subr.mxu0 0.0
  %492 = vmatpush2.msra.mxu0 0.0
  %493 = vmatprep.subr.mxu0 0.0
  %494 = vmatpush2.msra.mxu0 0.0
  %495 = vmatprep.subr.mxu0 0.0
  %496 = vmatpush2.msra.mxu0 0.0
  %497 = vmatprep.subr.mxu0 0.0
  %498 = vmatpush2.msra.mxu0 0.0
  %499 = vmatprep.subr.mxu0 0.0
  %500 = vmatpush2.msra.mxu0 0.0
  %501 = vmatprep.mubr.f32.mxu0 0.0
  %502 = vmatmul.mubr.f32.gmra.mxu0 %v358
  %v503 = vpop.f32.mrf.mxu0
  %v504 = vadd.f32 0.0, %v503
  %v505 = vpop.f32.mrf.mxu0
  %506 = vdwg.mxu0
  %v508 = vrot.slane %v504, 4
  %v510 = vadd.f32 %v108, %v508
  %v511 = vtanh.pop %v510
  %v513 = vrot.slane %v511, 4
  %v514 = vsel %vm124, %v513, 0
  %516 = vmatprep.subr.mxu0 0.0
  %517 = vmatpush1.msra.mxu0 0.0
  %518 = vmatprep.subr.mxu0 0.0
  %519 = vmatpush1.msra.mxu0 0.0
  %520 = vmatprep.subr.mxu0 0.0
  %521 = vmatpush1.msra.mxu0 0.0
  %522 = vmatprep.subr.mxu0 0.0
  %523 = vmatpush1.msra.mxu0 0.0
  %524 = vmatprep.subr.mxu0 0.0
  %525 = vmatpush1.msra.mxu0 0.0
  %526 = vmatprep.subr.mxu0 0.0
  %527 = vmatpush1.msra.mxu0 0.0
  %528 = vmatprep.subr.mxu0 0.0
  %529 = vmatpush1.msra.mxu0 0.0
  %530 = vmatprep.subr.mxu0 0.0
  %531 = vmatpush1.msra.mxu0 0.0
  %532 = vmatprep.subr.mxu0 0.0
  %533 = vmatpush1.msra.mxu0 0.0
  %534 = vmatprep.subr.mxu0 0.0
  %535 = vmatpush1.msra.mxu0 0.0
  %536 = vmatprep.subr.mxu0 0.0
  %537 = vmatpush1.msra.mxu0 0.0
  %538 = vmatprep.subr.mxu0 0.0
  %539 = vmatpush1.msra.mxu0 0.0
  %540 = vmatprep.subr.mxu0 0.0
  %541 = vmatpush1.msra.mxu0 %v123
  %542 = vmatprep.subr.mxu0 0.0
  %543 = vmatpush1.msra.mxu0 %v122
  %544 = vmatprep.subr.mxu0 0.0
  %545 = vmatpush1.msra.mxu0 %v121
  %546 = vmatprep.subr.mxu0 0.0
  %547 = vmatpush1.msra.mxu0 %v120
  %548 = vmatprep.subr.mxu0 0.0
  %549 = vmatpush2.msra.mxu0 0.0
  %550 = vmatprep.subr.mxu0 0.0
  %551 = vmatpush2.msra.mxu0 0.0
  %552 = vmatprep.subr.mxu0 0.0
  %553 = vmatpush2.msra.mxu0 0.0
  %554 = vmatprep.subr.mxu0 0.0
  %555 = vmatpush2.msra.mxu0 0.0
  %556 = vmatprep.subr.mxu0 0.0
  %557 = vmatpush2.msra.mxu0 0.0
  %558 = vmatprep.subr.mxu0 0.0
  %559 = vmatpush2.msra.mxu0 0.0
  %560 = vmatprep.subr.mxu0 0.0
  %561 = vmatpush2.msra.mxu0 0.0
  %562 = vmatprep.subr.mxu0 0.0
  %563 = vmatpush2.msra.mxu0 0.0
  %564 = vmatprep.subr.mxu0 0.0
  %565 = vmatpush2.msra.mxu0 0.0
  %566 = vmatprep.subr.mxu0 0.0
  %567 = vmatpush2.msra.mxu0 0.0
  %568 = vmatprep.subr.mxu0 0.0
  %569 = vmatpush2.msra.mxu0 0.0
  %570 = vmatprep.subr.mxu0 0.0
  %571 = vmatpush2.msra.mxu0 0.0
  %572 = vmatprep.subr.mxu0 0.0
  %573 = vmatpush2.msra.mxu0 0.0
  %574 = vmatprep.subr.mxu0 0.0
  %575 = vmatpush2.msra.mxu0 0.0
  %576 = vmatprep.subr.mxu0 0.0
  %577 = vmatpush2.msra.mxu0 0.0
  %578 = vmatprep.subr.mxu0 0.0
  %579 = vmatpush2.msra.mxu0 0.0
  %580 = vmatprep.mubr.f32.mxu0 0.0
  %581 = vmatmul.mubr.f32.gmra.mxu0 %v514
  %v582 = vpop.f32.mrf.mxu0
  %v583 = vadd.f32 0.0, %v582
  %v584 = vpop.f32.mrf.mxu0
  %585 = vdwg.mxu0
  %v586 = vxor.u32 %v583, 2147483648
  %v587 = vmul.f32 %v586, 1.442695
  %v588 = vpow.pop %v587
  %v589 = vadd.f32 %v588, 1.0
  %v590 = vrcp.pop %v589
  %v591 = vmul.f32 1.0, %v590
  %592 = vst.msk [vmem:[%s5 + $0x4] sm:$0x3] %vm279, %v591
  %593 = vmatprep.subr.mxu0 0.0
  %594 = vmatpush1.msra.mxu0 0.0
  %595 = vmatprep.subr.mxu0 0.0
  %596 = vmatpush1.msra.mxu0 0.0
  %597 = vmatprep.subr.mxu0 0.0
  %598 = vmatpush1.msra.mxu0 0.0
  %599 = vmatprep.subr.mxu0 0.0
  %600 = vmatpush1.msra.mxu0 0.0
  %601 = vmatprep.subr.mxu0 0.0
  %602 = vmatpush1.msra.mxu0 0.0
  %603 = vmatprep.subr.mxu0 0.0
  %604 = vmatpush1.msra.mxu0 0.0
  %605 = vmatprep.subr.mxu0 0.0
  %606 = vmatpush1.msra.mxu0 0.0
  %607 = vmatprep.subr.mxu0 0.0
  %608 = vmatpush1.msra.mxu0 0.0
  %609 = vmatprep.subr.mxu0 0.0
  %610 = vmatpush1.msra.mxu0 0.0
  %611 = vmatprep.subr.mxu0 0.0
  %612 = vmatpush1.msra.mxu0 0.0
  %613 = vmatprep.subr.mxu0 0.0
  %614 = vmatpush1.msra.mxu0 0.0
  %615 = vmatprep.subr.mxu0 0.0
  %616 = vmatpush1.msra.mxu0 0.0
  %617 = vmatprep.subr.mxu0 0.0
  %618 = vmatpush1.msra.mxu0 %v119
  %619 = vmatprep.subr.mxu0 0.0
  %620 = vmatpush1.msra.mxu0 %v118
  %621 = vmatprep.subr.mxu0 0.0
  %622 = vmatpush1.msra.mxu0 %v117
  %623 = vmatprep.subr.mxu0 0.0
  %624 = vmatpush1.msra.mxu0 %v116
  %625 = vmatprep.subr.mxu0 0.0
  %626 = vmatpush2.msra.mxu0 0.0
  %627 = vmatprep.subr.mxu0 0.0
  %628 = vmatpush2.msra.mxu0 0.0
  %629 = vmatprep.subr.mxu0 0.0
  %630 = vmatpush2.msra.mxu0 0.0
  %631 = vmatprep.subr.mxu0 0.0
  %632 = vmatpush2.msra.mxu0 0.0
  %633 = vmatprep.subr.mxu0 0.0
  %634 = vmatpush2.msra.mxu0 0.0
  %635 = vmatprep.subr.mxu0 0.0
  %636 = vmatpush2.msra.mxu0 0.0
  %637 = vmatprep.subr.mxu0 0.0
  %638 = vmatpush2.msra.mxu0 0.0
  %639 = vmatprep.subr.mxu0 0.0
  %640 = vmatpush2.msra.mxu0 0.0
  %641 = vmatprep.subr.mxu0 0.0
  %642 = vmatpush2.msra.mxu0 0.0
  %643 = vmatprep.subr.mxu0 0.0
  %644 = vmatpush2.msra.mxu0 0.0
  %645 = vmatprep.subr.mxu0 0.0
  %646 = vmatpush2.msra.mxu0 0.0
  %647 = vmatprep.subr.mxu0 0.0
  %648 = vmatpush2.msra.mxu0 0.0
  %649 = vmatprep.subr.mxu0 0.0
  %650 = vmatpush2.msra.mxu0 0.0
  %651 = vmatprep.subr.mxu0 0.0
  %652 = vmatpush2.msra.mxu0 0.0
  %653 = vmatprep.subr.mxu0 0.0
  %654 = vmatpush2.msra.mxu0 0.0
  %655 = vmatprep.subr.mxu0 0.0
  %656 = vmatpush2.msra.mxu0 0.0
  %657 = vmatprep.mubr.f32.mxu0 0.0
  %658 = vmatmul.mubr.f32.gmra.mxu0 %v514
  %v659 = vpop.f32.mrf.mxu0
  %v660 = vadd.f32 0.0, %v659
  %v661 = vpop.f32.mrf.mxu0
  %662 = vdwg.mxu0
  %v664 = vrot.slane %v660, 2
  %v666 = vadd.f32 %v108, %v664
  %v667 = vtanh.pop %v666
  %v669 = vrot.slane %v667, 6
  %v670 = vsel %vm124, %v669, 0
  %672 = vmatprep.subr.mxu0 0.0
  %673 = vmatpush1.msra.mxu0 0.0
  %674 = vmatprep.subr.mxu0 0.0
  %675 = vmatpush1.msra.mxu0 0.0
  %676 = vmatprep.subr.mxu0 0.0
  %677 = vmatpush1.msra.mxu0 0.0
  %678 = vmatprep.subr.mxu0 0.0
  %679 = vmatpush1.msra.mxu0 0.0
  %680 = vmatprep.subr.mxu0 0.0
  %681 = vmatpush1.msra.mxu0 0.0
  %682 = vmatprep.subr.mxu0 0.0
  %683 = vmatpush1.msra.mxu0 0.0
  %684 = vmatprep.subr.mxu0 0.0
  %685 = vmatpush1.msra.mxu0 0.0
  %686 = vmatprep.subr.mxu0 0.0
  %687 = vmatpush1.msra.mxu0 0.0
  %688 = vmatprep.subr.mxu0 0.0
  %689 = vmatpush1.msra.mxu0 0.0
  %690 = vmatprep.subr.mxu0 0.0
  %691 = vmatpush1.msra.mxu0 0.0
  %692 = vmatprep.subr.mxu0 0.0
  %693 = vmatpush1.msra.mxu0 0.0
  %694 = vmatprep.subr.mxu0 0.0
  %695 = vmatpush1.msra.mxu0 0.0
  %696 = vmatprep.subr.mxu0 0.0
  %697 = vmatpush1.msra.mxu0 %v123
  %698 = vmatprep.subr.mxu0 0.0
  %699 = vmatpush1.msra.mxu0 %v122
  %700 = vmatprep.subr.mxu0 0.0
  %701 = vmatpush1.msra.mxu0 %v121
  %702 = vmatprep.subr.mxu0 0.0
  %703 = vmatpush1.msra.mxu0 %v120
  %704 = vmatprep.subr.mxu0 0.0
  %705 = vmatpush2.msra.mxu0 0.0
  %706 = vmatprep.subr.mxu0 0.0
  %707 = vmatpush2.msra.mxu0 0.0
  %708 = vmatprep.subr.mxu0 0.0
  %709 = vmatpush2.msra.mxu0 0.0
  %710 = vmatprep.subr.mxu0 0.0
  %711 = vmatpush2.msra.mxu0 0.0
  %712 = vmatprep.subr.mxu0 0.0
  %713 = vmatpush2.msra.mxu0 0.0
  %714 = vmatprep.subr.mxu0 0.0
  %715 = vmatpush2.msra.mxu0 0.0
  %716 = vmatprep.subr.mxu0 0.0
  %717 = vmatpush2.msra.mxu0 0.0
  %718 = vmatprep.subr.mxu0 0.0
  %719 = vmatpush2.msra.mxu0 0.0
  %720 = vmatprep.subr.mxu0 0.0
  %721 = vmatpush2.msra.mxu0 0.0
  %722 = vmatprep.subr.mxu0 0.0
  %723 = vmatpush2.msra.mxu0 0.0
  %724 = vmatprep.subr.mxu0 0.0
  %725 = vmatpush2.msra.mxu0 0.0
  %726 = vmatprep.subr.mxu0 0.0
  %727 = vmatpush2.msra.mxu0 0.0
  %728 = vmatprep.subr.mxu0 0.0
  %729 = vmatpush2.msra.mxu0 0.0
  %730 = vmatprep.subr.mxu0 0.0
  %731 = vmatpush2.msra.mxu0 0.0
  %732 = vmatprep.subr.mxu0 0.0
  %733 = vmatpush2.msra.mxu0 0.0
  %734 = vmatprep.subr.mxu0 0.0
  %735 = vmatpush2.msra.mxu0 0.0
  %736 = vmatprep.mubr.f32.mxu0 0.0
  %737 = vmatmul.mubr.f32.gmra.mxu0 %v670
  %v738 = vpop.f32.mrf.mxu0
  %v739 = vadd.f32 0.0, %v738
  %v740 = vpop.f32.mrf.mxu0
  %741 = vdwg.mxu0
  %v742 = vxor.u32 %v739, 2147483648
  %v743 = vmul.f32 %v742, 1.442695
  %v744 = vpow.pop %v743
  %v745 = vadd.f32 %v744, 1.0
  %v746 = vrcp.pop %v745
  %v747 = vmul.f32 1.0, %v746
  %748 = vst.msk [vmem:[%s5 + $0x6] sm:$0x3] %vm279, %v747
  %749 = vmatprep.subr.mxu0 0.0
  %750 = vmatpush1.msra.mxu0 0.0
  %751 = vmatprep.subr.mxu0 0.0
  %752 = vmatpush1.msra.mxu0 0.0
  %753 = vmatprep.subr.mxu0 0.0
  %754 = vmatpush1.msra.mxu0 0.0
  %755 = vmatprep.subr.mxu0 0.0
  %756 = vmatpush1.msra.mxu0 0.0
  %757 = vmatprep.subr.mxu0 0.0
  %758 = vmatpush1.msra.mxu0 0.0
  %759 = vmatprep.subr.mxu0 0.0
  %760 = vmatpush1.msra.mxu0 0.0
  %761 = vmatprep.subr.mxu0 0.0
  %762 = vmatpush1.msra.mxu0 0.0
  %763 = vmatprep.subr.mxu0 0.0
  %764 = vmatpush1.msra.mxu0 0.0
  %765 = vmatprep.subr.mxu0 0.0
  %766 = vmatpush1.msra.mxu0 0.0
  %767 = vmatprep.subr.mxu0 0.0
  %768 = vmatpush1.msra.mxu0 0.0
  %769 = vmatprep.subr.mxu0 0.0
  %770 = vmatpush1.msra.mxu0 0.0
  %771 = vmatprep.subr.mxu0 0.0
  %772 = vmatpush1.msra.mxu0 0.0
  %773 = vmatprep.subr.mxu0 0.0
  %774 = vmatpush1.msra.mxu0 %v119
  %775 = vmatprep.subr.mxu0 0.0
  %776 = vmatpush1.msra.mxu0 %v118
  %777 = vmatprep.subr.mxu0 0.0
  %778 = vmatpush1.msra.mxu0 %v117
  %779 = vmatprep.subr.mxu0 0.0
  %780 = vmatpush1.msra.mxu0 %v116
  %781 = vmatprep.subr.mxu0 0.0
  %782 = vmatpush2.msra.mxu0 0.0
  %783 = vmatprep.subr.mxu0 0.0
  %784 = vmatpush2.msra.mxu0 0.0
  %785 = vmatprep.subr.mxu0 0.0
  %786 = vmatpush2.msra.mxu0 0.0
  %787 = vmatprep.subr.mxu0 0.0
  %788 = vmatpush2.msra.mxu0 0.0
  %789 = vmatprep.subr.mxu0 0.0
  %790 = vmatpush2.msra.mxu0 0.0
  %791 = vmatprep.subr.mxu0 0.0
  %792 = vmatpush2.msra.mxu0 0.0
  %793 = vmatprep.subr.mxu0 0.0
  %794 = vmatpush2.msra.mxu0 0.0
  %795 = vmatprep.subr.mxu0 0.0
  %796 = vmatpush2.msra.mxu0 0.0
  %797 = vmatprep.subr.mxu0 0.0
  %798 = vmatpush2.msra.mxu0 0.0
  %799 = vmatprep.subr.mxu0 0.0
  %800 = vmatpush2.msra.mxu0 0.0
  %801 = vmatprep.subr.mxu0 0.0
  %802 = vmatpush2.msra.mxu0 0.0
  %803 = vmatprep.subr.mxu0 0.0
  %804 = vmatpush2.msra.mxu0 0.0
  %805 = vmatprep.subr.mxu0 0.0
  %806 = vmatpush2.msra.mxu0 0.0
  %807 = vmatprep.subr.mxu0 0.0
  %808 = vmatpush2.msra.mxu0 0.0
  %809 = vmatprep.subr.mxu0 0.0
  %810 = vmatpush2.msra.mxu0 0.0
  %811 = vmatprep.subr.mxu0 0.0
  %812 = vmatpush2.msra.mxu0 0.0
  %813 = vmatprep.mubr.f32.mxu0 0.0
  %814 = vmatmul.mubr.f32.gmra.mxu0 %v670
  %v815 = vpop.f32.mrf.mxu0
  %v816 = vadd.f32 0.0, %v815
  %v817 = vpop.f32.mrf.mxu0
  %818 = vdwg.mxu0
  %v819 = vadd.f32 %v113, %v816
  %v820 = vtanh.pop %v819
  %v822 = vsel %vm124, %v820, 0
  %824 = vmatprep.subr.mxu0 0.0
  %825 = vmatpush1.msra.mxu0 0.0
  %826 = vmatprep.subr.mxu0 0.0
  %827 = vmatpush1.msra.mxu0 0.0
  %828 = vmatprep.subr.mxu0 0.0
  %829 = vmatpush1.msra.mxu0 0.0
  %830 = vmatprep.subr.mxu0 0.0
  %831 = vmatpush1.msra.mxu0 0.0
  %832 = vmatprep.subr.mxu0 0.0
  %833 = vmatpush1.msra.mxu0 0.0
  %834 = vmatprep.subr.mxu0 0.0
  %835 = vmatpush1.msra.mxu0 0.0
  %836 = vmatprep.subr.mxu0 0.0
  %837 = vmatpush1.msra.mxu0 0.0
  %838 = vmatprep.subr.mxu0 0.0
  %839 = vmatpush1.msra.mxu0 0.0
  %840 = vmatprep.subr.mxu0 0.0
  %841 = vmatpush1.msra.mxu0 0.0
  %842 = vmatprep.subr.mxu0 0.0
  %843 = vmatpush1.msra.mxu0 0.0
  %844 = vmatprep.subr.mxu0 0.0
  %845 = vmatpush1.msra.mxu0 0.0
  %846 = vmatprep.subr.mxu0 0.0
  %847 = vmatpush1.msra.mxu0 0.0
  %848 = vmatprep.subr.mxu0 0.0
  %849 = vmatpush1.msra.mxu0 %v123
  %850 = vmatprep.subr.mxu0 0.0
  %851 = vmatpush1.msra.mxu0 %v122
  %852 = vmatprep.subr.mxu0 0.0
  %853 = vmatpush1.msra.mxu0 %v121
  %854 = vmatprep.subr.mxu0 0.0
  %855 = vmatpush1.msra.mxu0 %v120
  %856 = vmatprep.subr.mxu0 0.0
  %857 = vmatpush2.msra.mxu0 0.0
  %858 = vmatprep.subr.mxu0 0.0
  %859 = vmatpush2.msra.mxu0 0.0
  %860 = vmatprep.subr.mxu0 0.0
  %861 = vmatpush2.msra.mxu0 0.0
  %862 = vmatprep.subr.mxu0 0.0
  %863 = vmatpush2.msra.mxu0 0.0
  %864 = vmatprep.subr.mxu0 0.0
  %865 = vmatpush2.msra.mxu0 0.0
  %866 = vmatprep.subr.mxu0 0.0
  %867 = vmatpush2.msra.mxu0 0.0
  %868 = vmatprep.subr.mxu0 0.0
  %869 = vmatpush2.msra.mxu0 0.0
  %870 = vmatprep.subr.mxu0 0.0
  %871 = vmatpush2.msra.mxu0 0.0
  %872 = vmatprep.subr.mxu0 0.0
  %873 = vmatpush2.msra.mxu0 0.0
  %874 = vmatprep.subr.mxu0 0.0
  %875 = vmatpush2.msra.mxu0 0.0
  %876 = vmatprep.subr.mxu0 0.0
  %877 = vmatpush2.msra.mxu0 0.0
  %878 = vmatprep.subr.mxu0 0.0
  %879 = vmatpush2.msra.mxu0 0.0
  %880 = vmatprep.subr.mxu0 0.0
  %881 = vmatpush2.msra.mxu0 0.0
  %882 = vmatprep.subr.mxu0 0.0
  %883 = vmatpush2.msra.mxu0 0.0
  %884 = vmatprep.subr.mxu0 0.0
  %885 = vmatpush2.msra.mxu0 0.0
  %886 = vmatprep.subr.mxu0 0.0
  %887 = vmatpush2.msra.mxu0 0.0
  %888 = vmatprep.mubr.f32.mxu0 0.0
  %889 = vmatmul.mubr.f32.gmra.mxu0 %v822
  %v890 = vpop.f32.mrf.mxu0
  %v891 = vadd.f32 0.0, %v890
  %v892 = vpop.f32.mrf.mxu0
  %893 = vdwg.mxu0
  %v894 = vxor.u32 %v891, 2147483648
  %v895 = vmul.f32 %v894, 1.442695
  %v896 = vpow.pop %v895
  %v897 = vadd.f32 %v896, 1.0
  %v898 = vrcp.pop %v897
  %v899 = vmul.f32 1.0, %v898
  %900 = vst.msk [vmem:[%s5 + $0x8] sm:$0x3] %vm279, %v899
  %901 = vmatprep.subr.mxu0 0.0
  %902 = vmatpush1.msra.mxu0 0.0
  %903 = vmatprep.subr.mxu0 0.0
  %904 = vmatpush1.msra.mxu0 0.0
  %905 = vmatprep.subr.mxu0 0.0
  %906 = vmatpush1.msra.mxu0 0.0
  %907 = vmatprep.subr.mxu0 0.0
  %908 = vmatpush1.msra.mxu0 0.0
  %909 = vmatprep.subr.mxu0 0.0
  %910 = vmatpush1.msra.mxu0 0.0
  %911 = vmatprep.subr.mxu0 0.0
  %912 = vmatpush1.msra.mxu0 0.0
  %913 = vmatprep.subr.mxu0 0.0
  %914 = vmatpush1.msra.mxu0 0.0
  %915 = vmatprep.subr.mxu0 0.0
  %916 = vmatpush1.msra.mxu0 0.0
  %917 = vmatprep.subr.mxu0 0.0
  %918 = vmatpush1.msra.mxu0 0.0
  %919 = vmatprep.subr.mxu0 0.0
  %920 = vmatpush1.msra.mxu0 0.0
  %921 = vmatprep.subr.mxu0 0.0
  %922 = vmatpush1.msra.mxu0 0.0
  %923 = vmatprep.subr.mxu0 0.0
  %924 = vmatpush1.msra.mxu0 0.0
  %925 = vmatprep.subr.mxu0 0.0
  %926 = vmatpush1.msra.mxu0 %v119
  %927 = vmatprep.subr.mxu0 0.0
  %928 = vmatpush1.msra.mxu0 %v118
  %929 = vmatprep.subr.mxu0 0.0
  %930 = vmatpush1.msra.mxu0 %v117
  %931 = vmatprep.subr.mxu0 0.0
  %932 = vmatpush1.msra.mxu0 %v116
  %933 = vmatprep.subr.mxu0 0.0
  %934 = vmatpush2.msra.mxu0 0.0
  %935 = vmatprep.subr.mxu0 0.0
  %936 = vmatpush2.msra.mxu0 0.0
  %937 = vmatprep.subr.mxu0 0.0
  %938 = vmatpush2.msra.mxu0 0.0
  %939 = vmatprep.subr.mxu0 0.0
  %940 = vmatpush2.msra.mxu0 0.0
  %941 = vmatprep.subr.mxu0 0.0
  %942 = vmatpush2.msra.mxu0 0.0
  %943 = vmatprep.subr.mxu0 0.0
  %944 = vmatpush2.msra.mxu0 0.0
  %945 = vmatprep.subr.mxu0 0.0
  %946 = vmatpush2.msra.mxu0 0.0
  %947 = vmatprep.subr.mxu0 0.0
  %948 = vmatpush2.msra.mxu0 0.0
  %949 = vmatprep.subr.mxu0 0.0
  %950 = vmatpush2.msra.mxu0 0.0
  %951 = vmatprep.subr.mxu0 0.0
  %952 = vmatpush2.msra.mxu0 0.0
  %953 = vmatprep.subr.mxu0 0.0
  %954 = vmatpush2.msra.mxu0 0.0
  %955 = vmatprep.subr.mxu0 0.0
  %956 = vmatpush2.msra.mxu0 0.0
  %957 = vmatprep.subr.mxu0 0.0
  %958 = vmatpush2.msra.mxu0 0.0
  %959 = vmatprep.subr.mxu0 0.0
  %960 = vmatpush2.msra.mxu0 0.0
  %961 = vmatprep.subr.mxu0 0.0
  %962 = vmatpush2.msra.mxu0 0.0
  %963 = vmatprep.subr.mxu0 0.0
  %964 = vmatpush2.msra.mxu0 0.0
  %965 = vmatprep.mubr.f32.mxu0 0.0
  %966 = vmatmul.mubr.f32.gmra.mxu0 %v822
  %v967 = vpop.f32.mrf.mxu0
  %v968 = vadd.f32 0.0, %v967
  %v969 = vpop.f32.mrf.mxu0
  %970 = vdwg.mxu0
  %v972 = vrot.slane %v968, 6
  %v974 = vadd.f32 %v113, %v972
  %v975 = vtanh.pop %v974
  %v977 = vrot.slane %v975, 2
  %v978 = vsel %vm124, %v977, 0
  %980 = vmatprep.subr.mxu0 0.0
  %981 = vmatpush1.msra.mxu0 0.0
  %982 = vmatprep.subr.mxu0 0.0
  %983 = vmatpush1.msra.mxu0 0.0
  %984 = vmatprep.subr.mxu0 0.0
  %985 = vmatpush1.msra.mxu0 0.0
  %986 = vmatprep.subr.mxu0 0.0
  %987 = vmatpush1.msra.mxu0 0.0
  %988 = vmatprep.subr.mxu0 0.0
  %989 = vmatpush1.msra.mxu0 0.0
  %990 = vmatprep.subr.mxu0 0.0
  %991 = vmatpush1.msra.mxu0 0.0
  %992 = vmatprep.subr.mxu0 0.0
  %993 = vmatpush1.msra.mxu0 0.0
  %994 = vmatprep.subr.mxu0 0.0
  %995 = vmatpush1.msra.mxu0 0.0
  %996 = vmatprep.subr.mxu0 0.0
  %997 = vmatpush1.msra.mxu0 0.0
  %998 = vmatprep.subr.mxu0 0.0
  %999 = vmatpush1.msra.mxu0 0.0
  %1000 = vmatprep.subr.mxu0 0.0
  %1001 = vmatpush1.msra.mxu0 0.0
  %1002 = vmatprep.subr.mxu0 0.0
  %1003 = vmatpush1.msra.mxu0 0.0
  %1004 = vmatprep.subr.mxu0 0.0
  %1005 = vmatpush1.msra.mxu0 %v123
  %1006 = vmatprep.subr.mxu0 0.0
  %1007 = vmatpush1.msra.mxu0 %v122
  %1008 = vmatprep.subr.mxu0 0.0
  %1009 = vmatpush1.msra.mxu0 %v121
  %1010 = vmatprep.subr.mxu0 0.0
  %1011 = vmatpush1.msra.mxu0 %v120
  %1012 = vmatprep.subr.mxu0 0.0
  %1013 = vmatpush2.msra.mxu0 0.0
  %1014 = vmatprep.subr.mxu0 0.0
  %1015 = vmatpush2.msra.mxu0 0.0
  %1016 = vmatprep.subr.mxu0 0.0
  %1017 = vmatpush2.msra.mxu0 0.0
  %1018 = vmatprep.subr.mxu0 0.0
  %1019 = vmatpush2.msra.mxu0 0.0
  %1020 = vmatprep.subr.mxu0 0.0
  %1021 = vmatpush2.msra.mxu0 0.0
  %1022 = vmatprep.subr.mxu0 0.0
  %1023 = vmatpush2.msra.mxu0 0.0
  %1024 = vmatprep.subr.mxu0 0.0
  %1025 = vmatpush2.msra.mxu0 0.0
  %1026 = vmatprep.subr.mxu0 0.0
  %1027 = vmatpush2.msra.mxu0 0.0
  %1028 = vmatprep.subr.mxu0 0.0
  %1029 = vmatpush2.msra.mxu0 0.0
  %1030 = vmatprep.subr.mxu0 0.0
  %1031 = vmatpush2.msra.mxu0 0.0
  %1032 = vmatprep.subr.mxu0 0.0
  %1033 = vmatpush2.msra.mxu0 0.0
  %1034 = vmatprep.subr.mxu0 0.0
  %1035 = vmatpush2.msra.mxu0 0.0
  %1036 = vmatprep.subr.mxu0 0.0
  %1037 = vmatpush2.msra.mxu0 0.0
  %1038 = vmatprep.subr.mxu0 0.0
  %1039 = vmatpush2.msra.mxu0 0.0
  %1040 = vmatprep.subr.mxu0 0.0
  %1041 = vmatpush2.msra.mxu0 0.0
  %1042 = vmatprep.subr.mxu0 0.0
  %1043 = vmatpush2.msra.mxu0 0.0
  %1044 = vmatprep.mubr.f32.mxu0 0.0
  %1045 = vmatmul.mubr.f32.gmra.mxu0 %v978
  %v1046 = vpop.f32.mrf.mxu0
  %v1047 = vadd.f32 0.0, %v1046
  %v1048 = vpop.f32.mrf.mxu0
  %1049 = vdwg.mxu0
  %v1050 = vxor.u32 %v1047, 2147483648
  %v1051 = vmul.f32 %v1050, 1.442695
  %v1052 = vpow.pop %v1051
  %v1053 = vadd.f32 %v1052, 1.0
  %v1054 = vrcp.pop %v1053
  %v1055 = vmul.f32 1.0, %v1054
  %1056 = vst.msk [vmem:[%s5 + $0xa] sm:$0x3] %vm279, %v1055
  %1057 = vmatprep.subr.mxu0 0.0
  %1058 = vmatpush1.msra.mxu0 0.0
  %1059 = vmatprep.subr.mxu0 0.0
  %1060 = vmatpush1.msra.mxu0 0.0
  %1061 = vmatprep.subr.mxu0 0.0
  %1062 = vmatpush1.msra.mxu0 0.0
  %1063 = vmatprep.subr.mxu0 0.0
  %1064 = vmatpush1.msra.mxu0 0.0
  %1065 = vmatprep.subr.mxu0 0.0
  %1066 = vmatpush1.msra.mxu0 0.0
  %1067 = vmatprep.subr.mxu0 0.0
  %1068 = vmatpush1.msra.mxu0 0.0
  %1069 = vmatprep.subr.mxu0 0.0
  %1070 = vmatpush1.msra.mxu0 0.0
  %1071 = vmatprep.subr.mxu0 0.0
  %1072 = vmatpush1.msra.mxu0 0.0
  %1073 = vmatprep.subr.mxu0 0.0
  %1074 = vmatpush1.msra.mxu0 0.0
  %1075 = vmatprep.subr.mxu0 0.0
  %1076 = vmatpush1.msra.mxu0 0.0
  %1077 = vmatprep.subr.mxu0 0.0
  %1078 = vmatpush1.msra.mxu0 0.0
  %1079 = vmatprep.subr.mxu0 0.0
  %1080 = vmatpush1.msra.mxu0 0.0
  %1081 = vmatprep.subr.mxu0 0.0
  %1082 = vmatpush1.msra.mxu0 %v119
  %1083 = vmatprep.subr.mxu0 0.0
  %1084 = vmatpush1.msra.mxu0 %v118
  %1085 = vmatprep.subr.mxu0 0.0
  %1086 = vmatpush1.msra.mxu0 %v117
  %1087 = vmatprep.subr.mxu0 0.0
  %1088 = vmatpush1.msra.mxu0 %v116
  %1089 = vmatprep.subr.mxu0 0.0
  %1090 = vmatpush2.msra.mxu0 0.0
  %1091 = vmatprep.subr.mxu0 0.0
  %1092 = vmatpush2.msra.mxu0 0.0
  %1093 = vmatprep.subr.mxu0 0.0
  %1094 = vmatpush2.msra.mxu0 0.0
  %1095 = vmatprep.subr.mxu0 0.0
  %1096 = vmatpush2.msra.mxu0 0.0
  %1097 = vmatprep.subr.mxu0 0.0
  %1098 = vmatpush2.msra.mxu0 0.0
  %1099 = vmatprep.subr.mxu0 0.0
  %1100 = vmatpush2.msra.mxu0 0.0
  %1101 = vmatprep.subr.mxu0 0.0
  %1102 = vmatpush2.msra.mxu0 0.0
  %1103 = vmatprep.subr.mxu0 0.0
  %1104 = vmatpush2.msra.mxu0 0.0
  %1105 = vmatprep.subr.mxu0 0.0
  %1106 = vmatpush2.msra.mxu0 0.0
  %1107 = vmatprep.subr.mxu0 0.0
  %1108 = vmatpush2.msra.mxu0 0.0
  %1109 = vmatprep.subr.mxu0 0.0
  %1110 = vmatpush2.msra.mxu0 0.0
  %1111 = vmatprep.subr.mxu0 0.0
  %1112 = vmatpush2.msra.mxu0 0.0
  %1113 = vmatprep.subr.mxu0 0.0
  %1114 = vmatpush2.msra.mxu0 0.0
  %1115 = vmatprep.subr.mxu0 0.0
  %1116 = vmatpush2.msra.mxu0 0.0
  %1117 = vmatprep.subr.mxu0 0.0
  %1118 = vmatpush2.msra.mxu0 0.0
  %1119 = vmatprep.subr.mxu0 0.0
  %1120 = vmatpush2.msra.mxu0 0.0
  %1121 = vmatprep.mubr.f32.mxu0 0.0
  %1122 = vmatmul.mubr.f32.gmra.mxu0 %v978
  %v1123 = vpop.f32.mrf.mxu0
  %v1124 = vadd.f32 0.0, %v1123
  %v1125 = vpop.f32.mrf.mxu0
  %1126 = vdwg.mxu0
  %v1128 = vrot.slane %v1124, 4
  %v1130 = vadd.f32 %v113, %v1128
  %v1131 = vtanh.pop %v1130
  %v1133 = vrot.slane %v1131, 4
  %v1134 = vsel %vm124, %v1133, 0
  %1136 = vmatprep.subr.mxu0 0.0
  %1137 = vmatpush1.msra.mxu0 0.0
  %1138 = vmatprep.subr.mxu0 0.0
  %1139 = vmatpush1.msra.mxu0 0.0
  %1140 = vmatprep.subr.mxu0 0.0
  %1141 = vmatpush1.msra.mxu0 0.0
  %1142 = vmatprep.subr.mxu0 0.0
  %1143 = vmatpush1.msra.mxu0 0.0
  %1144 = vmatprep.subr.mxu0 0.0
  %1145 = vmatpush1.msra.mxu0 0.0
  %1146 = vmatprep.subr.mxu0 0.0
  %1147 = vmatpush1.msra.mxu0 0.0
  %1148 = vmatprep.subr.mxu0 0.0
  %1149 = vmatpush1.msra.mxu0 0.0
  %1150 = vmatprep.subr.mxu0 0.0
  %1151 = vmatpush1.msra.mxu0 0.0
  %1152 = vmatprep.subr.mxu0 0.0
  %1153 = vmatpush1.msra.mxu0 0.0
  %1154 = vmatprep.subr.mxu0 0.0
  %1155 = vmatpush1.msra.mxu0 0.0
  %1156 = vmatprep.subr.mxu0 0.0
  %1157 = vmatpush1.msra.mxu0 0.0
  %1158 = vmatprep.subr.mxu0 0.0
  %1159 = vmatpush1.msra.mxu0 0.0
  %1160 = vmatprep.subr.mxu0 0.0
  %1161 = vmatpush1.msra.mxu0 %v123
  %1162 = vmatprep.subr.mxu0 0.0
  %1163 = vmatpush1.msra.mxu0 %v122
  %1164 = vmatprep.subr.mxu0 0.0
  %1165 = vmatpush1.msra.mxu0 %v121
  %1166 = vmatprep.subr.mxu0 0.0
  %1167 = vmatpush1.msra.mxu0 %v120
  %1168 = vmatprep.subr.mxu0 0.0
  %1169 = vmatpush2.msra.mxu0 0.0
  %1170 = vmatprep.subr.mxu0 0.0
  %1171 = vmatpush2.msra.mxu0 0.0
  %1172 = vmatprep.subr.mxu0 0.0
  %1173 = vmatpush2.msra.mxu0 0.0
  %1174 = vmatprep.subr.mxu0 0.0
  %1175 = vmatpush2.msra.mxu0 0.0
  %1176 = vmatprep.subr.mxu0 0.0
  %1177 = vmatpush2.msra.mxu0 0.0
  %1178 = vmatprep.subr.mxu0 0.0
  %1179 = vmatpush2.msra.mxu0 0.0
  %1180 = vmatprep.subr.mxu0 0.0
  %1181 = vmatpush2.msra.mxu0 0.0
  %1182 = vmatprep.subr.mxu0 0.0
  %1183 = vmatpush2.msra.mxu0 0.0
  %1184 = vmatprep.subr.mxu0 0.0
  %1185 = vmatpush2.msra.mxu0 0.0
  %1186 = vmatprep.subr.mxu0 0.0
  %1187 = vmatpush2.msra.mxu0 0.0
  %1188 = vmatprep.subr.mxu0 0.0
  %1189 = vmatpush2.msra.mxu0 0.0
  %1190 = vmatprep.subr.mxu0 0.0
  %1191 = vmatpush2.msra.mxu0 0.0
  %1192 = vmatprep.subr.mxu0 0.0
  %1193 = vmatpush2.msra.mxu0 0.0
  %1194 = vmatprep.subr.mxu0 0.0
  %1195 = vmatpush2.msra.mxu0 0.0
  %1196 = vmatprep.subr.mxu0 0.0
  %1197 = vmatpush2.msra.mxu0 0.0
  %1198 = vmatprep.subr.mxu0 0.0
  %1199 = vmatpush2.msra.mxu0 0.0
  %1200 = vmatprep.mubr.f32.mxu0 0.0
  %1201 = vmatmul.mubr.f32.gmra.mxu0 %v1134
  %v1202 = vpop.f32.mrf.mxu0
  %v1203 = vadd.f32 0.0, %v1202
  %v1204 = vpop.f32.mrf.mxu0
  %1205 = vdwg.mxu0
  %v1206 = vxor.u32 %v1203, 2147483648
  %v1207 = vmul.f32 %v1206, 1.442695
  %v1208 = vpow.pop %v1207
  %v1209 = vadd.f32 %v1208, 1.0
  %v1210 = vrcp.pop %v1209
  %v1211 = vmul.f32 1.0, %v1210
  %1212 = vst.msk [vmem:[%s5 + $0xc] sm:$0x3] %vm279, %v1211
  %1213 = vmatprep.subr.mxu0 0.0
  %1214 = vmatpush1.msra.mxu0 0.0
  %1215 = vmatprep.subr.mxu0 0.0
  %1216 = vmatpush1.msra.mxu0 0.0
  %1217 = vmatprep.subr.mxu0 0.0
  %1218 = vmatpush1.msra.mxu0 0.0
  %1219 = vmatprep.subr.mxu0 0.0
  %1220 = vmatpush1.msra.mxu0 0.0
  %1221 = vmatprep.subr.mxu0 0.0
  %1222 = vmatpush1.msra.mxu0 0.0
  %1223 = vmatprep.subr.mxu0 0.0
  %1224 = vmatpush1.msra.mxu0 0.0
  %1225 = vmatprep.subr.mxu0 0.0
  %1226 = vmatpush1.msra.mxu0 0.0
  %1227 = vmatprep.subr.mxu0 0.0
  %1228 = vmatpush1.msra.mxu0 0.0
  %1229 = vmatprep.subr.mxu0 0.0
  %1230 = vmatpush1.msra.mxu0 0.0
  %1231 = vmatprep.subr.mxu0 0.0
  %1232 = vmatpush1.msra.mxu0 0.0
  %1233 = vmatprep.subr.mxu0 0.0
  %1234 = vmatpush1.msra.mxu0 0.0
  %1235 = vmatprep.subr.mxu0 0.0
  %1236 = vmatpush1.msra.mxu0 0.0
  %1237 = vmatprep.subr.mxu0 0.0
  %1238 = vmatpush1.msra.mxu0 %v119
  %1239 = vmatprep.subr.mxu0 0.0
  %1240 = vmatpush1.msra.mxu0 %v118
  %1241 = vmatprep.subr.mxu0 0.0
  %1242 = vmatpush1.msra.mxu0 %v117
  %1243 = vmatprep.subr.mxu0 0.0
  %1244 = vmatpush1.msra.mxu0 %v116
  %1245 = vmatprep.subr.mxu0 0.0
  %1246 = vmatpush2.msra.mxu0 0.0
  %1247 = vmatprep.subr.mxu0 0.0
  %1248 = vmatpush2.msra.mxu0 0.0
  %1249 = vmatprep.subr.mxu0 0.0
  %1250 = vmatpush2.msra.mxu0 0.0
  %1251 = vmatprep.subr.mxu0 0.0
  %1252 = vmatpush2.msra.mxu0 0.0
  %1253 = vmatprep.subr.mxu0 0.0
  %1254 = vmatpush2.msra.mxu0 0.0
  %1255 = vmatprep.subr.mxu0 0.0
  %1256 = vmatpush2.msra.mxu0 0.0
  %1257 = vmatprep.subr.mxu0 0.0
  %1258 = vmatpush2.msra.mxu0 0.0
  %1259 = vmatprep.subr.mxu0 0.0
  %1260 = vmatpush2.msra.mxu0 0.0
  %1261 = vmatprep.subr.mxu0 0.0
  %1262 = vmatpush2.msra.mxu0 0.0
  %1263 = vmatprep.subr.mxu0 0.0
  %1264 = vmatpush2.msra.mxu0 0.0
  %1265 = vmatprep.subr.mxu0 0.0
  %1266 = vmatpush2.msra.mxu0 0.0
  %1267 = vmatprep.subr.mxu0 0.0
  %1268 = vmatpush2.msra.mxu0 0.0
  %1269 = vmatprep.subr.mxu0 0.0
  %1270 = vmatpush2.msra.mxu0 0.0
  %1271 = vmatprep.subr.mxu0 0.0
  %1272 = vmatpush2.msra.mxu0 0.0
  %1273 = vmatprep.subr.mxu0 0.0
  %1274 = vmatpush2.msra.mxu0 0.0
  %1275 = vmatprep.subr.mxu0 0.0
  %1276 = vmatpush2.msra.mxu0 0.0
  %1277 = vmatprep.mubr.f32.mxu0 0.0
  %1278 = vmatmul.mubr.f32.gmra.mxu0 %v1134
  %v1279 = vpop.f32.mrf.mxu0
  %v1280 = vadd.f32 0.0, %v1279
  %v1281 = vpop.f32.mrf.mxu0
  %1282 = vdwg.mxu0
  %v1284 = vrot.slane %v1280, 2
  %v1286 = vadd.f32 %v113, %v1284
  %v1287 = vtanh.pop %v1286
  %v1289 = vrot.slane %v1287, 6
  %v1290 = vsel %vm124, %v1289, 0
  %1292 = vmatprep.subr.mxu0 0.0
  %1293 = vmatpush1.msra.mxu0 0.0
  %1294 = vmatprep.subr.mxu0 0.0
  %1295 = vmatpush1.msra.mxu0 0.0
  %1296 = vmatprep.subr.mxu0 0.0
  %1297 = vmatpush1.msra.mxu0 0.0
  %1298 = vmatprep.subr.mxu0 0.0
  %1299 = vmatpush1.msra.mxu0 0.0
  %1300 = vmatprep.subr.mxu0 0.0
  %1301 = vmatpush1.msra.mxu0 0.0
  %1302 = vmatprep.subr.mxu0 0.0
  %1303 = vmatpush1.msra.mxu0 0.0
  %1304 = vmatprep.subr.mxu0 0.0
  %1305 = vmatpush1.msra.mxu0 0.0
  %1306 = vmatprep.subr.mxu0 0.0
  %1307 = vmatpush1.msra.mxu0 0.0
  %1308 = vmatprep.subr.mxu0 0.0
  %1309 = vmatpush1.msra.mxu0 0.0
  %1310 = vmatprep.subr.mxu0 0.0
  %1311 = vmatpush1.msra.mxu0 0.0
  %1312 = vmatprep.subr.mxu0 0.0
  %1313 = vmatpush1.msra.mxu0 0.0
  %1314 = vmatprep.subr.mxu0 0.0
  %1315 = vmatpush1.msra.mxu0 0.0
  %1316 = vmatprep.subr.mxu0 0.0
  %1317 = vmatpush1.msra.mxu0 %v123
  %1318 = vmatprep.subr.mxu0 0.0
  %1319 = vmatpush1.msra.mxu0 %v122
  %1320 = vmatprep.subr.mxu0 0.0
  %1321 = vmatpush1.msra.mxu0 %v121
  %1322 = vmatprep.subr.mxu0 0.0
  %1323 = vmatpush1.msra.mxu0 %v120
  %1324 = vmatprep.subr.mxu0 0.0
  %1325 = vmatpush2.msra.mxu0 0.0
  %1326 = vmatprep.subr.mxu0 0.0
  %1327 = vmatpush2.msra.mxu0 0.0
  %1328 = vmatprep.subr.mxu0 0.0
  %1329 = vmatpush2.msra.mxu0 0.0
  %1330 = vmatprep.subr.mxu0 0.0
  %1331 = vmatpush2.msra.mxu0 0.0
  %1332 = vmatprep.subr.mxu0 0.0
  %1333 = vmatpush2.msra.mxu0 0.0
  %1334 = vmatprep.subr.mxu0 0.0
  %1335 = vmatpush2.msra.mxu0 0.0
  %1336 = vmatprep.subr.mxu0 0.0
  %1337 = vmatpush2.msra.mxu0 0.0
  %1338 = vmatprep.subr.mxu0 0.0
  %1339 = vmatpush2.msra.mxu0 0.0
  %1340 = vmatprep.subr.mxu0 0.0
  %1341 = vmatpush2.msra.mxu0 0.0
  %1342 = vmatprep.subr.mxu0 0.0
  %1343 = vmatpush2.msra.mxu0 0.0
  %1344 = vmatprep.subr.mxu0 0.0
  %1345 = vmatpush2.msra.mxu0 0.0
  %1346 = vmatprep.subr.mxu0 0.0
  %1347 = vmatpush2.msra.mxu0 0.0
  %1348 = vmatprep.subr.mxu0 0.0
  %1349 = vmatpush2.msra.mxu0 0.0
  %1350 = vmatprep.subr.mxu0 0.0
  %1351 = vmatpush2.msra.mxu0 0.0
  %1352 = vmatprep.subr.mxu0 0.0
  %1353 = vmatpush2.msra.mxu0 0.0
  %1354 = vmatprep.subr.mxu0 0.0
  %1355 = vmatpush2.msra.mxu0 0.0
  %1356 = vmatprep.mubr.f32.mxu0 0.0
  %1357 = vmatmul.mubr.f32.gmra.mxu0 %v1290
  %v1358 = vpop.f32.mrf.mxu0
  %v1359 = vadd.f32 0.0, %v1358
  %v1360 = vpop.f32.mrf.mxu0
  %1361 = vdwg.mxu0
  %v1362 = vxor.u32 %v1359, 2147483648
  %v1363 = vmul.f32 %v1362, 1.442695
  %v1364 = vpow.pop %v1363
  %v1365 = vadd.f32 %v1364, 1.0
  %v1366 = vrcp.pop %v1365
  %v1367 = vmul.f32 1.0, %v1366
  %1368 = vst.msk [vmem:[%s5 + $0xe] sm:$0x3] %vm279, %v1367
  // Predicated region
  $region22: #{tpu_custom_call.1} parent=0 // pred_check
    _
  $region23: #{tpu_custom_call.1} parent=0 // pred_check_branch
    %1370 = sbr.rel (0) target = $region25
  $region24: #{tpu_custom_call.1} parent=0 // pred_region
    _
  $region25: #{tpu_custom_call.1} parent=0 // pred_fallthru
    _
  // Predicated region
  $region26: #{tpu_custom_call.1} parent=0 // pred_check
    _
  $region27: #{tpu_custom_call.1} parent=0 // pred_check_branch
    %1372 = sbr.rel (0) target = $region29
  $region28: #{tpu_custom_call.1} parent=0 // pred_region
    _
  $region29: #{tpu_custom_call.1} parent=0 // pred_fallthru
    _

</llo_original>
